<compile_context>
chip_gen: v5e
topology: v5e:2x2
jax: 0.10.0
libtpu: 0.0.40
codegen_flags: <defaults>
</compile_context>

<pallas_src>
import functools

import jax
import jax.numpy as jnp
from jax.experimental import pallas as pl
from jax.experimental.pallas import tpu as pltpu

OUT_PAD = 128    # lane-dense padded output width (unmasked full-lane vst)
MIN_TB = 256     # smallest streaming tile for non-tiny batches
MAX_TB = 4096    # cap keeps double-buffered VMEM << v5e's 16 MiB scoped default
TARGET_STEPS = 8 # aim for >= ~8 grid steps: pipelining + both v7x TensorCores


def _cdiv(a, b):
    return -(-a // b)


def _round_up(a, b):
    return _cdiv(a, b) * b


def _pick_batch_tile(batch):
    """Adaptive batch tile: cover tiny batches exactly, otherwise a large tile
    in [MIN_TB, MAX_TB] that still yields >= TARGET_STEPS grid steps."""
    if batch <= MIN_TB:
        return max(8, _round_up(batch, 8))
    tile = _round_up(_cdiv(batch, TARGET_STEPS), MIN_TB)
    return max(MIN_TB, min(MAX_TB, tile))


def _policy_value_kernel(x_ref, w1_ref, b1_ref, w2_ref, b2_ref, out_ref, *,
                         dim_out):
    # x_ref: (TB, dim_in), w1: (dim_in, H), b1: (1, H),
    # w2: (H, OUT_PAD) zero-padded past dim_out, b2: (1, OUT_PAD) zero-padded.
    x = x_ref[...].astype(w1_ref.dtype)        # in-kernel cast (no wrapper pass)

    # fc1 + ReLU (f32 accumulation, f32 elementwise)
    h = jnp.dot(x, w1_ref[...], preferred_element_type=jnp.float32) + b1_ref[...]
    h = jnp.maximum(h, 0.0)                                           # (TB, H)

    # fc2 (padded to OUT_PAD lanes).  With the default f32 compute_dtype the
    # astype is a no-op; with bf16 weights it intentionally drops fc1's f32
    # accumulation before the second MXU pass (documented precision tradeoff).
    y = jnp.dot(h.astype(w2_ref.dtype), w2_ref[...],
                preferred_element_type=jnp.float32) + b2_ref[...]     # (TB, OUT_PAD)

    col = jax.lax.broadcasted_iota(jnp.int32, y.shape, 1)
    is_logit = col < (dim_out - 1)        # first dim_out-1 columns -> softmax
    is_value = col == (dim_out - 1)       # last real column        -> softplus

    # masked, max-subtracted softmax over the logit columns
    neg_inf = jnp.float32(-jnp.inf)
    logits = jnp.where(is_logit, y, neg_inf)
    m = jnp.max(logits, axis=-1, keepdims=True)
    e = jnp.exp(logits - m)                          # exact 0 at masked columns
    denom = jnp.sum(e, axis=-1, keepdims=True)
    probs = e * pl.reciprocal(denom, approx=True)    # EUP vrcp (free slot)

    # numerically stable softplus (selected only on the value column); the
    # full-width transcendental passes are free filler under the HBM stream.
    sp = jnp.maximum(y, 0.0) + jnp.log1p(jnp.exp(-jnp.abs(y)))

    # single lane-dense store: [probs..., value, zero padding]
    out_ref[...] = jnp.where(is_value, sp, probs).astype(out_ref.dtype)


def prepare_params(w1, b1, w2, b2, compute_dtype=jnp.float32):
    """One-time parameter prep (hoisted out of the hot path).

    w1: (dim_in, hidden), b1: (hidden,), w2: (hidden, dim_out), b2: (dim_out,)
    Weights are stored pre-transposed vs. PyTorch nn.Linear.
    NOTE: w2/b2 padding past dim_out must stay exactly zero (it is built from
    zeros here); re-run prepare_params after any in-place parameter update.
    """
    dim_in, hidden = w1.shape
    hidden2, dim_out = w2.shape
    assert hidden2 == hidden and b1.shape == (hidden,) and b2.shape == (dim_out,)
    assert 2 <= dim_out <= OUT_PAD

    w1c = w1.astype(compute_dtype)
    b1c = b1.reshape(1, hidden).astype(jnp.float32)
    w2p = jnp.zeros((hidden, OUT_PAD), compute_dtype).at[:, :dim_out].set(
        w2.astype(compute_dtype))
    b2p = jnp.zeros((1, OUT_PAD), jnp.float32).at[0, :dim_out].set(
        b2.astype(jnp.float32))
    return (w1c, b1c, w2p, b2p, dim_out)


def policy_value_forward_batched(x, params, out_dtype=jnp.bfloat16):
    """x: (B, dim_in). Returns (probs: (B, dim_out-1) f32, value: (B,) f32)."""
    w1, b1, w2p, b2p, dim_out = params
    batch, dim_in = x.shape
    hidden = w1.shape[1]

    tb = _pick_batch_tile(batch)
    grid = _cdiv(batch, tb)   # ragged last block handled by Pallas (masked write)

    out = pl.pallas_call(
        functools.partial(_policy_value_kernel, dim_out=dim_out),
        out_shape=jax.ShapeDtypeStruct((batch, OUT_PAD), out_dtype),
        grid_spec=pltpu.PrefetchScalarGridSpec(
            num_scalar_prefetch=0,
            grid=(grid,),
            in_specs=[
                pl.BlockSpec((tb, dim_in), lambda i: (i, 0)),       # x: streams
                pl.BlockSpec((dim_in, hidden), lambda i: (0, 0)),   # W1: resident
                pl.BlockSpec((1, hidden), lambda i: (0, 0)),        # b1: resident
                pl.BlockSpec((hidden, OUT_PAD), lambda i: (0, 0)),  # W2: resident
                pl.BlockSpec((1, OUT_PAD), lambda i: (0, 0)),       # b2: resident
            ],
            out_specs=pl.BlockSpec((tb, OUT_PAD), lambda i: (i, 0)),
        ),
        compiler_params=pltpu.CompilerParams(
            dimension_semantics=("parallel",)),   # v7x: shard grid over 2 TCs
    )(x, w1, b1, w2p, b2p)

    probs = out[:, :dim_out - 1].astype(jnp.float32)
    value = out[:, dim_out - 1].astype(jnp.float32)
    return probs, value


def policy_value_forward(x, params, out_dtype=jnp.bfloat16):
    """Module-faithful single-state path: x (dim_in,) -> ((dim_out-1,), (1,))."""
    probs, value = policy_value_forward_batched(x[None, :], params, out_dtype)
    return probs[0], value[0:1]


if __name__ == "__main__":
    dim_in, hidden, dim_out = 16, 32, 8
    batch = 1000   # not a tile multiple -> exercises the ragged cdiv grid (4 steps)

    key = jax.random.PRNGKey(0)
    kx, k1, kb1, k2, kb2 = jax.random.split(key, 5)

    x = jax.random.normal(kx, (batch, dim_in), dtype=jnp.float32)
    w1 = jax.random.normal(k1, (dim_in, hidden), dtype=jnp.float32) * 0.1
    b1 = jax.random.normal(kb1, (hidden,), dtype=jnp.float32) * 0.1
    w2 = jax.random.normal(k2, (hidden, dim_out), dtype=jnp.float32) * 0.1
    b2 = jax.random.normal(kb2, (dim_out,), dtype=jnp.float32) * 0.1

    # One-time parameter prep (out of the hot loop); f32 matmul operands.
    params = prepare_params(w1, b1, w2, b2, compute_dtype=jnp.float32)

    # pure-JAX reference
    h = jnp.maximum(x @ w1 + b1, 0.0)
    y = h @ w2 + b2
    ref_probs = jax.nn.softmax(y[:, :dim_out - 1], axis=-1)
    ref_value = jax.nn.softplus(y[:, dim_out - 1])

    # Default perf path: bf16 output slab (half the HBM write bytes).
    probs, value = jax.block_until_ready(policy_value_forward_batched(x, params))
    assert probs.shape == (batch, dim_out - 1) and value.shape == (batch,)
    assert jnp.allclose(probs, ref_probs, atol=1e-2, rtol=1e-2)
    assert jnp.allclose(value, ref_value, atol=1e-2, rtol=1e-2)
    assert jnp.allclose(jnp.sum(probs, axis=-1), 1.0, atol=2e-2)

    # Exact-output path: f32 slab (only slack left is the approx reciprocal).
    probs32, value32 = jax.block_until_ready(
        policy_value_forward_batched(x, params, out_dtype=jnp.float32))
    assert jnp.allclose(probs32, ref_probs, atol=5e-3, rtol=5e-3)
    assert jnp.allclose(value32, ref_value, atol=1e-5, rtol=1e-5)
    assert jnp.allclose(jnp.sum(probs32, axis=-1), 1.0, atol=5e-3)

    # Module-faithful single-state path (exercises the tiny-batch tile).
    p1, v1 = jax.block_until_ready(policy_value_forward(x[0], params))
    assert p1.shape == (dim_out - 1,) and v1.shape == (1,)
    assert jnp.allclose(p1, ref_probs[0], atol=1e-2, rtol=1e-2)
    assert jnp.allclose(v1, ref_value[0:1], atol=1e-2, rtol=1e-2)

    print("KERNEL_OK")
</pallas_src>

<mosaic_0001>
module attributes {stable_mosaic.version = 11 : i64} {
  func.func @_policy_value_kernel(%arg0: i32, %arg1: memref<256x16xf32, #tpu.memory_space<vmem>>, %arg2: memref<16x32xf32, #tpu.memory_space<vmem>>, %arg3: memref<1x32xf32, #tpu.memory_space<vmem>>, %arg4: memref<32x128xf32, #tpu.memory_space<vmem>>, %arg5: memref<1x128xf32, #tpu.memory_space<vmem>>, %arg6: memref<256x128xbf16, #tpu.memory_space<vmem>>) attributes {dimension_semantics = [#tpu.dimension_semantics<parallel>], iteration_bounds = array<i64: 4>, scalar_prefetch = 0 : i64, scratch_operands = 0 : i64, tpu.core_type = #tpu.core_type<tc>, window_params = [{transform_indices = @transform_0, window_bounds = array<i64: 256, 16>}, {pipeline_mode = #tpu.pipeline_mode<synchronous>, transform_indices = @transform_1, window_bounds = array<i64: 16, 32>}, {pipeline_mode = #tpu.pipeline_mode<synchronous>, transform_indices = @transform_2, window_bounds = array<i64: 1, 32>}, {pipeline_mode = #tpu.pipeline_mode<synchronous>, transform_indices = @transform_3, window_bounds = array<i64: 32, 128>}, {pipeline_mode = #tpu.pipeline_mode<synchronous>, transform_indices = @transform_4, window_bounds = array<i64: 1, 128>}, {transform_indices = @transform_5, window_bounds = array<i64: 256, 128>}]} {
    %c0 = arith.constant 0 : index
    %c0_0 = arith.constant 0 : index
    %0 = vector.load %arg1[%c0, %c0_0] : memref<256x16xf32, #tpu.memory_space<vmem>>, vector<256x16xf32>
    %c0_1 = arith.constant 0 : index
    %c0_2 = arith.constant 0 : index
    %1 = vector.load %arg2[%c0_1, %c0_2] : memref<16x32xf32, #tpu.memory_space<vmem>>, vector<16x32xf32>
    %cst = arith.constant dense<0.000000e+00> : vector<256x32xf32>
    %2 = tpu.matmul %0, %1, %cst {dimension_numbers = #tpu.dot_dimension_numbers<[1], [0], [0], [1], [0, 0, 1, 1], [], []>} : vector<256x16xf32>, vector<16x32xf32>, vector<256x32xf32> -> vector<256x32xf32>
    %c0_3 = arith.constant 0 : index
    %c0_4 = arith.constant 0 : index
    %3 = vector.load %arg3[%c0_3, %c0_4] : memref<1x32xf32, #tpu.memory_space<vmem>>, vector<1x32xf32>
    %4 = vector.broadcast %3 : vector<1x32xf32> to vector<256x32xf32>
    %5 = arith.addf %2, %4 : vector<256x32xf32>
    %cst_5 = arith.constant 0.000000e+00 : f32
    %6 = vector.broadcast %cst_5 : f32 to vector<256x32xf32>
    %7 = arith.maximumf %5, %6 : vector<256x32xf32>
    %c0_6 = arith.constant 0 : index
    %c0_7 = arith.constant 0 : index
    %8 = vector.load %arg4[%c0_6, %c0_7] : memref<32x128xf32, #tpu.memory_space<vmem>>, vector<32x128xf32>
    %cst_8 = arith.constant dense<0.000000e+00> : vector<256x128xf32>
    %9 = tpu.matmul %7, %8, %cst_8 {dimension_numbers = #tpu.dot_dimension_numbers<[1], [0], [0], [1], [0, 0, 1, 1], [], []>} : vector<256x32xf32>, vector<32x128xf32>, vector<256x128xf32> -> vector<256x128xf32>
    %c0_9 = arith.constant 0 : index
    %c0_10 = arith.constant 0 : index
    %10 = vector.load %arg5[%c0_9, %c0_10] : memref<1x128xf32, #tpu.memory_space<vmem>>, vector<1x128xf32>
    %11 = vector.broadcast %10 : vector<1x128xf32> to vector<256x128xf32>
    %12 = arith.addf %9, %11 : vector<256x128xf32>
    %13 = tpu.iota {dimensions = array<i32: 1>} : vector<256x128xi32>
    %c7_i32 = arith.constant 7 : i32
    %14 = vector.broadcast %c7_i32 : i32 to vector<256x128xi32>
    %15 = arith.cmpi slt, %13, %14 : vector<256x128xi32>
    %c7_i32_11 = arith.constant 7 : i32
    %16 = vector.broadcast %c7_i32_11 : i32 to vector<256x128xi32>
    %17 = arith.cmpi eq, %13, %16 : vector<256x128xi32>
    %cst_12 = arith.constant 0xFF800000 : f32
    %18 = vector.broadcast %cst_12 : f32 to vector<256x128xf32>
    %19 = arith.select %15, %12, %18 : vector<256x128xi1>, vector<256x128xf32>
    %cst_13 = arith.constant dense<0xFF800000> : vector<256xf32>
    %20 = vector.multi_reduction <maximumf>, %19, %cst_13 [1] : vector<256x128xf32> to vector<256xf32>
    %21 = vector.shape_cast %20 : vector<256xf32> to vector<256x1xf32>
    %22 = vector.broadcast %21 : vector<256x1xf32> to vector<256x128xf32>
    %23 = arith.subf %19, %22 : vector<256x128xf32>
    %24 = math.exp %23 : vector<256x128xf32>
    %cst_14 = arith.constant dense<0.000000e+00> : vector<256xf32>
    %25 = vector.multi_reduction <add>, %24, %cst_14 [1] : vector<256x128xf32> to vector<256xf32>
    %26 = vector.shape_cast %25 : vector<256xf32> to vector<256x1xf32>
    %27 = tpu.reciprocal %26 {approx = true} : vector<256x1xf32> -> vector<256x1xf32>
    %28 = vector.broadcast %27 : vector<256x1xf32> to vector<256x128xf32>
    %29 = arith.mulf %24, %28 : vector<256x128xf32>
    %cst_15 = arith.constant 0.000000e+00 : f32
    %30 = vector.broadcast %cst_15 : f32 to vector<256x128xf32>
    %31 = arith.maximumf %12, %30 : vector<256x128xf32>
    %32 = math.absf %12 : vector<256x128xf32>
    %cst_16 = arith.constant 0.000000e+00 : f32
    %33 = vector.broadcast %cst_16 : f32 to vector<256x128xf32>
    %34 = arith.subf %33, %32 : vector<256x128xf32>
    %35 = math.exp %34 : vector<256x128xf32>
    %36 = math.log1p %35 : vector<256x128xf32>
    %37 = arith.addf %31, %36 : vector<256x128xf32>
    %38 = arith.select %17, %37, %29 : vector<256x128xi1>, vector<256x128xf32>
    %39 = arith.truncf %38 : vector<256x128xf32> to vector<256x128xbf16>
    %c0_17 = arith.constant 0 : index
    %c0_18 = arith.constant 0 : index
    %40 = vector.load %arg6[%c0_17, %c0_18] : memref<256x128xbf16, #tpu.memory_space<vmem>>, vector<256x128xbf16>
    tpu.vector_store %arg6[%c0_17, %c0_18], %39 {strides = array<i32>} : memref<256x128xbf16, #tpu.memory_space<vmem>>, vector<256x128xbf16>,
    return
  }
  func.func @transform_0(%arg0: i32) -> (i32, i32) {
    %c0_i32 = arith.constant 0 : i32
    %c0_i32_0 = arith.constant 0 : i32
    return %arg0, %c0_i32 : i32, i32
  }
  func.func @transform_1(%arg0: i32) -> (i32, i32) {
    %c0_i32 = arith.constant 0 : i32
    %c0_i32_0 = arith.constant 0 : i32
    %c0_i32_1 = arith.constant 0 : i32
    return %c0_i32, %c0_i32_0 : i32, i32
  }
  func.func @transform_2(%arg0: i32) -> (i32, i32) {
    %c0_i32 = arith.constant 0 : i32
    %c0_i32_0 = arith.constant 0 : i32
    %c0_i32_1 = arith.constant 0 : i32
    return %c0_i32, %c0_i32_0 : i32, i32
  }
  func.func @transform_3(%arg0: i32) -> (i32, i32) {
    %c0_i32 = arith.constant 0 : i32
    %c0_i32_0 = arith.constant 0 : i32
    %c0_i32_1 = arith.constant 0 : i32
    return %c0_i32, %c0_i32_0 : i32, i32
  }
  func.func @transform_4(%arg0: i32) -> (i32, i32) {
    %c0_i32 = arith.constant 0 : i32
    %c0_i32_0 = arith.constant 0 : i32
    %c0_i32_1 = arith.constant 0 : i32
    return %c0_i32, %c0_i32_0 : i32, i32
  }
  func.func @transform_5(%arg0: i32) -> (i32, i32) {
    %c0_i32 = arith.constant 0 : i32
    %c0_i32_0 = arith.constant 0 : i32
    return %arg0, %c0_i32 : i32, i32
  }
}

</mosaic_0001>

<llo_original>
// kernel: tpu_custom_call.1
$region0: #{tpu_custom_call.1}
  #allocation0 [shape = 'u32[]', space=smem, size = 0x4, offset = 0x4, fixed_abs, tag = 'smem constant byte address 0x4 - core index']
  #allocation1 [shape = 'u32[72,128]{1,0:T(1,128)}', space=vmem, size = 0x9000, scoped, tag = 'internal scratch']
  %s0 = inlined_call_operand.vmem [shape: f32[1000,16], index: 0, kind: input, shape index: {}]
  %s1 = inlined_call_operand.vmem [shape: f32[16,32], index: 1, kind: input, shape index: {}]
  %s2 = inlined_call_operand.vmem [shape: f32[1,32], index: 2, kind: input, shape index: {}]
  %s3 = inlined_call_operand.vmem [shape: f32[32,128], index: 3, kind: input, shape index: {}]
  %s4 = inlined_call_operand.vmem [shape: f32[1,128], index: 4, kind: input, shape index: {}]
  %s5 = inlined_call_operand.hbm [shape: bf16[1000,128], index: 5, kind: output, shape index: {}]
  %s6 = sld [smem:[#allocation0]]
  $region53: #{tpu_custom_call.1} parent=0
    _
  %s8 = ssub.s32 1, %s6
  %s9 = scalar_select 0, %s8, %s6
  $region1: #{tpu_custom_call.1} parent=0
    #allocation2 [shape = 'u8[131072]{0}', space=vmem, size = 0x20000, scoped, tag = 'output window, operand 0']
    #allocation3 [shape = 's32[2]{0}', space=sflag, size = 0x8, scoped, tag = 'scoped memory for tpu_custom_call.1']
    %10 = vsyncpa [#allocation3], 0
    %s11 = scalar_lea.sflag [#allocation3], 1
    %12 = vsyncpa %s11, 0
    loop: start=0, step=1, limit=6
    $region2: #{tpu_custom_call.1} parent=1 // loop_pre_header
      _
    $region3: #{tpu_custom_call.1} parent=1 // loop_header
      %s14 = sphi 0, %s18
      %p15 = scmp.ge.s32.totalorder %s14, 6
      %s24 = sphi 0, %s26
      %s27 = sphi 0, %s24
      %s28 = sphi 0, %s27
      %s44 = sphi 0, %s28
      %s48 = sphi 0, %s48
      %s50 = sphi 0, %s48
      %s51 = sphi 0, %s50
      %s65 = sphi 0, %s51
      %s69 = sphi 0, %s69
      %s71 = sphi 0, %s69
      %s72 = sphi 0, %s71
      %s86 = sphi 0, %s72
      %s90 = sphi 0, %s90
      %s92 = sphi 0, %s90
      %s93 = sphi 0, %s92
      %s107 = sphi 0, %s93
      %s111 = sphi 0, %s111
      %s113 = sphi 0, %s111
      %s114 = sphi 0, %s113
      %s128 = sphi 0, %s114
      %s134 = sphi 0, %s136
      %s137 = sphi 0, %s134
      %s138 = sphi 0, %s137
      %s154 = sphi 0, %s138
    $region4: #{tpu_custom_call.1} parent=1 // loop_header_branch
      %17 = sbr.rel (%p15) target = $region8
    $region5: #{tpu_custom_call.1} parent=1 // loop_body
      %s19 = ssub.s32 %s14, 1
      %s20 = ssub.s32 %s14, 2
      %s21 = sadd.s32 %s14, 1
      %s22 = ssub.s32 %s14, %s21
      %p23 = scmp.eq.s32.totalorder %s22, 0
      %s25 = sadd.s32 %s24, 1
      %s26 = scalar_select %p23, %s24, %s25
      %p29 = pneg %p23
      %p30 = scmp.eq.s32.totalorder %s14, 3
      %p31 = por %p29, %p30
      %p32 = scmp.ne.s32.totalorder %s24, %s27
      %p33 = scmp.eq.s32.totalorder %s14, 0
      %p34 = por %p32, %p33
      %p35 = scmp.ne.s32.totalorder %s24, %s27
      %p36 = scmp.eq.s32.totalorder %s19, 3
      %p37 = por %p35, %p36
      %p38 = scmp.ne.s32.totalorder %s27, %s28
      %p39 = scmp.eq.s32.totalorder %s19, 0
      %p40 = por %p38, %p39
      %p41 = scmp.ne.s32.totalorder %s27, %s28
      %p42 = scmp.eq.s32.totalorder %s20, 3
      %p43 = por %p41, %p42
      %p45 = scmp.ne.s32.totalorder %s28, %s44
      %p46 = scmp.eq.s32.totalorder %s20, 0
      %p47 = por %p45, %p46
      %s49 = sadd.s32 %s48, 1
      %p52 = scmp.eq.s32.totalorder %s14, 3
      %p53 = scmp.ne.s32.totalorder %s48, %s50
      %p54 = scmp.eq.s32.totalorder %s14, 0
      %p55 = por %p53, %p54
      %p56 = scmp.ne.s32.totalorder %s48, %s50
      %p57 = scmp.eq.s32.totalorder %s19, 3
      %p58 = por %p56, %p57
      %p59 = scmp.ne.s32.totalorder %s50, %s51
      %p60 = scmp.eq.s32.totalorder %s19, 0
      %p61 = por %p59, %p60
      %p62 = scmp.ne.s32.totalorder %s50, %s51
      %p63 = scmp.eq.s32.totalorder %s20, 3
      %p64 = por %p62, %p63
      %p66 = scmp.ne.s32.totalorder %s51, %s65
      %p67 = scmp.eq.s32.totalorder %s20, 0
      %p68 = por %p66, %p67
      %s70 = sadd.s32 %s69, 1
      %p73 = scmp.eq.s32.totalorder %s14, 3
      %p74 = scmp.ne.s32.totalorder %s69, %s71
      %p75 = scmp.eq.s32.totalorder %s14, 0
      %p76 = por %p74, %p75
      %p77 = scmp.ne.s32.totalorder %s69, %s71
      %p78 = scmp.eq.s32.totalorder %s19, 3
      %p79 = por %p77, %p78
      %p80 = scmp.ne.s32.totalorder %s71, %s72
      %p81 = scmp.eq.s32.totalorder %s19, 0
      %p82 = por %p80, %p81
      %p83 = scmp.ne.s32.totalorder %s71, %s72
      %p84 = scmp.eq.s32.totalorder %s20, 3
      %p85 = por %p83, %p84
      %p87 = scmp.ne.s32.totalorder %s72, %s86
      %p88 = scmp.eq.s32.totalorder %s20, 0
      %p89 = por %p87, %p88
      %s91 = sadd.s32 %s90, 1
      %p94 = scmp.eq.s32.totalorder %s14, 3
      %p95 = scmp.ne.s32.totalorder %s90, %s92
      %p96 = scmp.eq.s32.totalorder %s14, 0
      %p97 = por %p95, %p96
      %p98 = scmp.ne.s32.totalorder %s90, %s92
      %p99 = scmp.eq.s32.totalorder %s19, 3
      %p100 = por %p98, %p99
      %p101 = scmp.ne.s32.totalorder %s92, %s93
      %p102 = scmp.eq.s32.totalorder %s19, 0
      %p103 = por %p101, %p102
      %p104 = scmp.ne.s32.totalorder %s92, %s93
      %p105 = scmp.eq.s32.totalorder %s20, 3
      %p106 = por %p104, %p105
      %p108 = scmp.ne.s32.totalorder %s93, %s107
      %p109 = scmp.eq.s32.totalorder %s20, 0
      %p110 = por %p108, %p109
      %s112 = sadd.s32 %s111, 1
      %p115 = scmp.eq.s32.totalorder %s14, 3
      %p116 = scmp.ne.s32.totalorder %s111, %s113
      %p117 = scmp.eq.s32.totalorder %s14, 0
      %p118 = por %p116, %p117
      %p119 = scmp.ne.s32.totalorder %s111, %s113
      %p120 = scmp.eq.s32.totalorder %s19, 3
      %p121 = por %p119, %p120
      %p122 = scmp.ne.s32.totalorder %s113, %s114
      %p123 = scmp.eq.s32.totalorder %s19, 0
      %p124 = por %p122, %p123
      %p125 = scmp.ne.s32.totalorder %s113, %s114
      %p126 = scmp.eq.s32.totalorder %s20, 3
      %p127 = por %p125, %p126
      %p129 = scmp.ne.s32.totalorder %s114, %s128
      %p130 = scmp.eq.s32.totalorder %s20, 0
      %p131 = por %p129, %p130
      %s132 = ssub.s32 %s14, %s21
      %p133 = scmp.eq.s32.totalorder %s132, 0
      %s135 = sadd.s32 %s134, 1
      %s136 = scalar_select %p133, %s134, %s135
      %p139 = pneg %p133
      %p140 = scmp.eq.s32.totalorder %s14, 3
      %p141 = por %p139, %p140
      %p142 = scmp.ne.s32.totalorder %s134, %s137
      %p143 = scmp.eq.s32.totalorder %s14, 0
      %p144 = por %p142, %p143
      %p145 = scmp.ne.s32.totalorder %s134, %s137
      %p146 = scmp.eq.s32.totalorder %s19, 3
      %p147 = por %p145, %p146
      %p148 = scmp.ne.s32.totalorder %s137, %s138
      %p149 = scmp.eq.s32.totalorder %s19, 0
      %p150 = por %p148, %p149
      %p151 = scmp.ne.s32.totalorder %s137, %s138
      %p152 = scmp.eq.s32.totalorder %s20, 3
      %p153 = por %p151, %p152
      %p155 = scmp.ne.s32.totalorder %s138, %s154
      %p156 = scmp.eq.s32.totalorder %s20, 0
      %p157 = por %p155, %p156
      %p158 = scmp.le.s32.totalorder 1, %s14
      %p159 = scmp.lt.s32.totalorder %s14, 5
      %p160 = pnand %p158, %p159
      %p161 = pneg %p160
      // Predicated region
      $region9: #{tpu_custom_call.1} parent=5 // pred_check
        _
      $region10: #{tpu_custom_call.1} parent=5 // pred_check_branch
        %163 = sbr.rel (%p160) target = $region12
      $region11: #{tpu_custom_call.1} parent=5 // pred_region
        %s164 = ssub.s32 %s14, 1
        // Predicated region
        $region13: #{tpu_custom_call.1} parent=11 // pred_check
          %p165 = pneg %p61
        $region14: #{tpu_custom_call.1} parent=11 // pred_check_branch
          %167 = sbr.rel (%p165) target = $region16
        $region15: #{tpu_custom_call.1} parent=11 // pred_region
          _
        $region16: #{tpu_custom_call.1} parent=11 // pred_fallthru
          _
        // Predicated region
        $region17: #{tpu_custom_call.1} parent=11 // pred_check
          %p168 = pneg %p82
        $region18: #{tpu_custom_call.1} parent=11 // pred_check_branch
          %170 = sbr.rel (%p168) target = $region20
        $region19: #{tpu_custom_call.1} parent=11 // pred_region
          _
        $region20: #{tpu_custom_call.1} parent=11 // pred_fallthru
          _
        // Predicated region
        $region21: #{tpu_custom_call.1} parent=11 // pred_check
          %p171 = pneg %p103
        $region22: #{tpu_custom_call.1} parent=11 // pred_check_branch
          %173 = sbr.rel (%p171) target = $region24
        $region23: #{tpu_custom_call.1} parent=11 // pred_region
          _
        $region24: #{tpu_custom_call.1} parent=11 // pred_fallthru
          _
        // Predicated region
        $region25: #{tpu_custom_call.1} parent=11 // pred_check
          %p174 = pneg %p124
        $region26: #{tpu_custom_call.1} parent=11 // pred_check_branch
          %176 = sbr.rel (%p174) target = $region28
        $region27: #{tpu_custom_call.1} parent=11 // pred_region
          _
        $region28: #{tpu_custom_call.1} parent=11 // pred_fallthru
          _
      $region12: #{tpu_custom_call.1} parent=5 // pred_fallthru
        _
      %p177 = scmp.lt.s32.totalorder %s14, 4
      // Predicated region
      $region29: #{tpu_custom_call.1} parent=5 // pred_check
        %p178 = pneg %p177
      $region30: #{tpu_custom_call.1} parent=5 // pred_check_branch
        %180 = sbr.rel (%p178) target = $region32
      $region31: #{tpu_custom_call.1} parent=5 // pred_region
        // Predicated region
        $region33: #{tpu_custom_call.1} parent=31 // pred_check
          %p181 = pneg %p34
        $region34: #{tpu_custom_call.1} parent=31 // pred_check_branch
          %183 = sbr.rel (%p181) target = $region36
        $region35: #{tpu_custom_call.1} parent=31 // pred_region
          %s184 = smul.u32 32, %s14
          %s185 = ssub.s32 125, %s184
          %p186 = scmp.lt.s32.totalorder %s185, 32
          %s187 = scalar_select %p186, %s185, 32
          %s188 = smul.u32 8, %s187
          %p189 = scmp.lt.s32.totalorder %s184, 124
          %s190 = scalar_select %p189, %s184, 124
          %s191 = smul.addr %s190, 8
          %s192 = scalar_lea.vmem %s0, %s191
          %s193 = smul.u32 32, %s14
          %s194 = ssub.s32 125, %s193
          %p195 = scmp.lt.s32.totalorder %s194, 32
          %s196 = scalar_select %p195, %s194, 32
          %s197 = smul.u32 8, %s196
        $region36: #{tpu_custom_call.1} parent=31 // pred_fallthru
          _
      $region32: #{tpu_custom_call.1} parent=5 // pred_fallthru
        _
      %p198 = scmp.le.s32.totalorder 1, %s14
      %p199 = scmp.lt.s32.totalorder %s14, 5
      %p200 = pnand %p198, %p199
      %p201 = pneg %p200
      // Predicated region
      $region37: #{tpu_custom_call.1} parent=5 // pred_check
        _
      $region38: #{tpu_custom_call.1} parent=5 // pred_check_branch
        %203 = sbr.rel (%p200) target = $region40
      $region39: #{tpu_custom_call.1} parent=5 // pred_region
        %s204 = ssub.s32 %s14, 1
        %s205 = smul.u32 32, %s19
        %s206 = ssub.s32 125, %s205
        %p207 = scmp.lt.s32.totalorder %s206, 32
        %s208 = scalar_select %p207, %s206, 32
        %s209 = smul.u32 8, %s208
        %p210 = scmp.lt.s32.totalorder %s205, 124
        %s211 = scalar_select %p210, %s205, 124
        %s212 = smul.addr %s211, 8
        %s213 = scalar_lea.vmem %s0, %s212
        %p214 = pneg %p40
        %p215 = pneg %p37
        %p216 = pneg %p61
        %p217 = pneg %p58
        %p218 = pneg %p82
        %p219 = pneg %p79
        %p220 = pneg %p103
        %p221 = pneg %p100
        %p222 = pneg %p124
        %p223 = pneg %p121
        %p224 = pneg %p150
        %p225 = pneg %p147
        %s226 = sand.u32 %s137, 1
        %s227 = scalar_lea.sflag [#allocation3], %s226
        %s228 = sand.u32 %s137, 1
        %s229 = smul.addr %s228, 128
        %s230 = scalar_lea.vmem [#allocation2], %s229
        %s231 = smul.u32 32, %s19
        %s232 = ssub.s32 125, %s231
        %p233 = scmp.lt.s32.totalorder %s232, 32
        %s234 = scalar_select %p233, %s232, 32
        %s235 = smul.u32 8, %s234
        %p236 = scmp.lt.s32.totalorder %s231, 124
        %s237 = scalar_select %p236, %s231, 124
        %s238 = smul.addr %s237, 8
        %s239 = scalar_lea.vmem %s0, %s238
        %s240 = smul.u32 32, %s19
        %s241 = ssub.s32 125, %s240
        %p242 = scmp.lt.s32.totalorder %s241, 32
        %s243 = scalar_select %p242, %s241, 32
        %s244 = smul.u32 8, %s243
        %s245 = smul.u32 32, %s19
        %s246 = ssub.s32 125, %s245
        %p247 = scmp.lt.s32.totalorder %s246, 32
        %s248 = scalar_select %p247, %s246, 32
        %s249 = smul.u32 4, %s248
        %v250 = vld [vmem:[%s239] sm:$0xff]
        %v251 = vld [vmem:[%s239 + $0x8] sm:$0xff]
        %v252 = vld [vmem:[%s239 + $0x10] sm:$0xff]
        %v253 = vld [vmem:[%s239 + $0x18] sm:$0xff]
        %v254 = vld [vmem:[%s239 + $0x20] sm:$0xff]
        %v255 = vld [vmem:[%s239 + $0x28] sm:$0xff]
        %v256 = vld [vmem:[%s239 + $0x30] sm:$0xff]
        %v257 = vld [vmem:[%s239 + $0x38] sm:$0xff]
        %v258 = vld [vmem:[%s239 + $0x40] sm:$0xff]
        %v259 = vld [vmem:[%s239 + $0x48] sm:$0xff]
        %v260 = vld [vmem:[%s239 + $0x50] sm:$0xff]
        %v261 = vld [vmem:[%s239 + $0x58] sm:$0xff]
        %v262 = vld [vmem:[%s239 + $0x60] sm:$0xff]
        %v263 = vld [vmem:[%s239 + $0x68] sm:$0xff]
        %v264 = vld [vmem:[%s239 + $0x70] sm:$0xff]
        %v265 = vld [vmem:[%s239 + $0x78] sm:$0xff]
        %v266 = vld [vmem:[%s239 + $0x80] sm:$0xff]
        %v267 = vld [vmem:[%s239 + $0x88] sm:$0xff]
        %v268 = vld [vmem:[%s239 + $0x90] sm:$0xff]
        %v269 = vld [vmem:[%s239 + $0x98] sm:$0xff]
        %v270 = vld [vmem:[%s239 + $0xa0] sm:$0xff]
        %v271 = vld [vmem:[%s239 + $0xa8] sm:$0xff]
        %v272 = vld [vmem:[%s239 + $0xb0] sm:$0xff]
        %v273 = vld [vmem:[%s239 + $0xb8] sm:$0xff]
        %v274 = vld [vmem:[%s239 + $0xc0] sm:$0xff]
        %v275 = vld [vmem:[%s239 + $0xc8] sm:$0xff]
        %v276 = vld [vmem:[%s239 + $0xd0] sm:$0xff]
        %v277 = vld [vmem:[%s239 + $0xd8] sm:$0xff]
        %v278 = vld [vmem:[%s239 + $0xe0] sm:$0xff]
        %v279 = vld [vmem:[%s239 + $0xe8] sm:$0xff]
        %v280 = vld [vmem:[%s239 + $0xf0] sm:$0xff]
        %v281 = vld [vmem:[%s239 + $0xf8] sm:$0xff]
        %v282 = vld [vmem:[%s1] sm:$0xff]
        %v283 = vld [vmem:[%s1 + $0x8] sm:$0xff]
        %v284 = vld [vmem:[%s2] sm:$0x1]
        %v286 = vperm.slane %v284, 0
        %vm288 = vcmask 130048
        %v290 = vsel %vm288, %v250, 0
        %v293 = vsel %vm288, %v251, 0
        %v296 = vsel %vm288, %v252, 0
        %v299 = vsel %vm288, %v253, 0
        %v302 = vsel %vm288, %v254, 0
        %v305 = vsel %vm288, %v255, 0
        %v308 = vsel %vm288, %v256, 0
        %v311 = vsel %vm288, %v257, 0
        %v314 = vsel %vm288, %v258, 0
        %v317 = vsel %vm288, %v259, 0
        %v320 = vsel %vm288, %v260, 0
        %v323 = vsel %vm288, %v261, 0
        %v326 = vsel %vm288, %v262, 0
        %v329 = vsel %vm288, %v263, 0
        %v332 = vsel %vm288, %v264, 0
        %v335 = vsel %vm288, %v265, 0
        %v338 = vsel %vm288, %v266, 0
        %v341 = vsel %vm288, %v267, 0
        %v344 = vsel %vm288, %v268, 0
        %v347 = vsel %vm288, %v269, 0
        %v350 = vsel %vm288, %v270, 0
        %v353 = vsel %vm288, %v271, 0
        %v356 = vsel %vm288, %v272, 0
        %v359 = vsel %vm288, %v273, 0
        %v362 = vsel %vm288, %v274, 0
        %v365 = vsel %vm288, %v275, 0
        %v368 = vsel %vm288, %v276, 0
        %v371 = vsel %vm288, %v277, 0
        %v374 = vsel %vm288, %v278, 0
        %v377 = vsel %vm288, %v279, 0
        %v380 = vsel %vm288, %v280, 0
        %v383 = vsel %vm288, %v281, 0
        %385 = vmatpush.msra.mxu0 0.0
        %386 = vmatpush.msra.mxu0 0.0
        %387 = vmatpush.msra.mxu0 0.0
        %388 = vmatpush.msra.mxu0 0.0
        %389 = vmatpush.msra.mxu0 0.0
        %390 = vmatpush.msra.mxu0 0.0
        %391 = vmatpush.msra.mxu0 0.0
        %392 = vmatpush.msra.mxu0 0.0
        %393 = vmatpush.msra.mxu0 0.0
        %394 = vmatpush.msra.mxu0 0.0
        %395 = vmatpush.msra.mxu0 0.0
        %396 = vmatpush.msra.mxu0 0.0
        %397 = vmatpush.msra.mxu0 0.0
        %398 = vmatpush.msra.mxu0 0.0
        %399 = vmatpush.msra.mxu0 %v283
        %400 = vmatpush.msra.mxu0 %v282
        %401 = vmatmul.f32.gmra.mxu0 %v290
        %v402 = vpop.f32.mrf.mxu0
        %v403 = vadd.f32 %v286, %v402
        %404 = vmatmul.f32.gmra.mxu0 %v293
        %v405 = vpop.f32.mrf.mxu0
        %v406 = vadd.f32 %v286, %v405
        %407 = vmatmul.f32.gmra.mxu0 %v296
        %v408 = vpop.f32.mrf.mxu0
        %v409 = vadd.f32 %v286, %v408
        %410 = vmatmul.f32.gmra.mxu0 %v299
        %v411 = vpop.f32.mrf.mxu0
        %v412 = vadd.f32 %v286, %v411
        %413 = vmatmul.f32.gmra.mxu0 %v302
        %v414 = vpop.f32.mrf.mxu0
        %v415 = vadd.f32 %v286, %v414
        %416 = vmatmul.f32.gmra.mxu0 %v305
        %v417 = vpop.f32.mrf.mxu0
        %v418 = vadd.f32 %v286, %v417
        %419 = vmatmul.f32.gmra.mxu0 %v308
        %v420 = vpop.f32.mrf.mxu0
        %v421 = vadd.f32 %v286, %v420
        %422 = vmatmul.f32.gmra.mxu0 %v311
        %v423 = vpop.f32.mrf.mxu0
        %v424 = vadd.f32 %v286, %v423
        %425 = vmatmul.f32.gmra.mxu0 %v314
        %v426 = vpop.f32.mrf.mxu0
        %v427 = vadd.f32 %v286, %v426
        %428 = vmatmul.f32.gmra.mxu0 %v317
        %v429 = vpop.f32.mrf.mxu0
        %v430 = vadd.f32 %v286, %v429
        %431 = vmatmul.f32.gmra.mxu0 %v320
        %v432 = vpop.f32.mrf.mxu0
        %v433 = vadd.f32 %v286, %v432
        %434 = vmatmul.f32.gmra.mxu0 %v323
        %v435 = vpop.f32.mrf.mxu0
        %v436 = vadd.f32 %v286, %v435
        %437 = vmatmul.f32.gmra.mxu0 %v326
        %v438 = vpop.f32.mrf.mxu0
        %v439 = vadd.f32 %v286, %v438
        %440 = vmatmul.f32.gmra.mxu0 %v329
        %v441 = vpop.f32.mrf.mxu0
        %v442 = vadd.f32 %v286, %v441
        %443 = vmatmul.f32.gmra.mxu0 %v332
        %v444 = vpop.f32.mrf.mxu0
        %v445 = vadd.f32 %v286, %v444
        %446 = vmatmul.f32.gmra.mxu0 %v335
        %v447 = vpop.f32.mrf.mxu0
        %v448 = vadd.f32 %v286, %v447
        %449 = vmatmul.f32.gmra.mxu0 %v338
        %v450 = vpop.f32.mrf.mxu0
        %v451 = vadd.f32 %v286, %v450
        %452 = vmatmul.f32.gmra.mxu0 %v341
        %v453 = vpop.f32.mrf.mxu0
        %v454 = vadd.f32 %v286, %v453
        %455 = vmatmul.f32.gmra.mxu0 %v344
        %v456 = vpop.f32.mrf.mxu0
        %v457 = vadd.f32 %v286, %v456
        %458 = vmatmul.f32.gmra.mxu0 %v347
        %v459 = vpop.f32.mrf.mxu0
        %v460 = vadd.f32 %v286, %v459
        %461 = vmatmul.f32.gmra.mxu0 %v350
        %v462 = vpop.f32.mrf.mxu0
        %v463 = vadd.f32 %v286, %v462
        %464 = vmatmul.f32.gmra.mxu0 %v353
        %v465 = vpop.f32.mrf.mxu0
        %v466 = vadd.f32 %v286, %v465
        %467 = vmatmul.f32.gmra.mxu0 %v356
        %v468 = vpop.f32.mrf.mxu0
        %v469 = vadd.f32 %v286, %v468
        %470 = vmatmul.f32.gmra.mxu0 %v359
        %v471 = vpop.f32.mrf.mxu0
        %v472 = vadd.f32 %v286, %v471
        %473 = vmatmul.f32.gmra.mxu0 %v362
        %v474 = vpop.f32.mrf.mxu0
        %v475 = vadd.f32 %v286, %v474
        %476 = vmatmul.f32.gmra.mxu0 %v365
        %v477 = vpop.f32.mrf.mxu0
        %v478 = vadd.f32 %v286, %v477
        %479 = vmatmul.f32.gmra.mxu0 %v368
        %v480 = vpop.f32.mrf.mxu0
        %v481 = vadd.f32 %v286, %v480
        %482 = vmatmul.f32.gmra.mxu0 %v371
        %v483 = vpop.f32.mrf.mxu0
        %v484 = vadd.f32 %v286, %v483
        %485 = vmatmul.f32.gmra.mxu0 %v374
        %v486 = vpop.f32.mrf.mxu0
        %v487 = vadd.f32 %v286, %v486
        %488 = vmatmul.f32.gmra.mxu0 %v377
        %v489 = vpop.f32.mrf.mxu0
        %v490 = vadd.f32 %v286, %v489
        %491 = vmatmul.f32.gmra.mxu0 %v380
        %v492 = vpop.f32.mrf.mxu0
        %v493 = vadd.f32 %v286, %v492
        %494 = vmatmul.f32.gmra.mxu0 %v383
        %v495 = vpop.f32.mrf.mxu0
        %v496 = vadd.f32 %v286, %v495
        %497 = vdwg.mxu0
        %v498 = vmax.f32 %v403, 0.0
        %v499 = vmax.f32 %v406, 0.0
        %v500 = vmax.f32 %v409, 0.0
        %v501 = vmax.f32 %v412, 0.0
        %v502 = vmax.f32 %v415, 0.0
        %v503 = vmax.f32 %v418, 0.0
        %v504 = vmax.f32 %v421, 0.0
        %v505 = vmax.f32 %v424, 0.0
        %v506 = vmax.f32 %v427, 0.0
        %v507 = vmax.f32 %v430, 0.0
        %v508 = vmax.f32 %v433, 0.0
        %v509 = vmax.f32 %v436, 0.0
        %v510 = vmax.f32 %v439, 0.0
        %v511 = vmax.f32 %v442, 0.0
        %v512 = vmax.f32 %v445, 0.0
        %v513 = vmax.f32 %v448, 0.0
        %v514 = vmax.f32 %v451, 0.0
        %v515 = vmax.f32 %v454, 0.0
        %v516 = vmax.f32 %v457, 0.0
        %v517 = vmax.f32 %v460, 0.0
        %v518 = vmax.f32 %v463, 0.0
        %v519 = vmax.f32 %v466, 0.0
        %v520 = vmax.f32 %v469, 0.0
        %v521 = vmax.f32 %v472, 0.0
        %v522 = vmax.f32 %v475, 0.0
        %v523 = vmax.f32 %v478, 0.0
        %v524 = vmax.f32 %v481, 0.0
        %v525 = vmax.f32 %v484, 0.0
        %v526 = vmax.f32 %v487, 0.0
        %v527 = vmax.f32 %v490, 0.0
        %v528 = vmax.f32 %v493, 0.0
        %v529 = vmax.f32 %v496, 0.0
        %v530 = vld [vmem:[%s3] sm:$0xff]
        %v531 = vld [vmem:[%s3 + $0x8] sm:$0xff]
        %v532 = vld [vmem:[%s3 + $0x10] sm:$0xff]
        %v533 = vld [vmem:[%s3 + $0x18] sm:$0xff]
        %v534 = vld [vmem:[%s4] sm:$0x1]
        %v536 = vperm.slane %v534, 0
        %vm538 = vcmask 261120
        %v540 = vsel %vm538, %v498, 0
        %v543 = vsel %vm538, %v499, 0
        %v546 = vsel %vm538, %v500, 0
        %v549 = vsel %vm538, %v501, 0
        %v552 = vsel %vm538, %v502, 0
        %v555 = vsel %vm538, %v503, 0
        %v558 = vsel %vm538, %v504, 0
        %v561 = vsel %vm538, %v505, 0
        %v564 = vsel %vm538, %v506, 0
        %v567 = vsel %vm538, %v507, 0
        %v570 = vsel %vm538, %v508, 0
        %v573 = vsel %vm538, %v509, 0
        %v576 = vsel %vm538, %v510, 0
        %v579 = vsel %vm538, %v511, 0
        %v582 = vsel %vm538, %v512, 0
        %v585 = vsel %vm538, %v513, 0
        %v588 = vsel %vm538, %v514, 0
        %v591 = vsel %vm538, %v515, 0
        %v594 = vsel %vm538, %v516, 0
        %v597 = vsel %vm538, %v517, 0
        %v600 = vsel %vm538, %v518, 0
        %v603 = vsel %vm538, %v519, 0
        %v606 = vsel %vm538, %v520, 0
        %v609 = vsel %vm538, %v521, 0
        %v612 = vsel %vm538, %v522, 0
        %v615 = vsel %vm538, %v523, 0
        %v618 = vsel %vm538, %v524, 0
        %v621 = vsel %vm538, %v525, 0
        %v624 = vsel %vm538, %v526, 0
        %v627 = vsel %vm538, %v527, 0
        %v630 = vsel %vm538, %v528, 0
        %v633 = vsel %vm538, %v529, 0
        %635 = vmatpush.msra.mxu0 0.0
        %636 = vmatpush.msra.mxu0 0.0
        %637 = vmatpush.msra.mxu0 0.0
        %638 = vmatpush.msra.mxu0 0.0
        %639 = vmatpush.msra.mxu0 0.0
        %640 = vmatpush.msra.mxu0 0.0
        %641 = vmatpush.msra.mxu0 0.0
        %642 = vmatpush.msra.mxu0 0.0
        %643 = vmatpush.msra.mxu0 0.0
        %644 = vmatpush.msra.mxu0 0.0
        %645 = vmatpush.msra.mxu0 0.0
        %646 = vmatpush.msra.mxu0 0.0
        %647 = vmatpush.msra.mxu0 %v533
        %648 = vmatpush.msra.mxu0 %v532
        %649 = vmatpush.msra.mxu0 %v531
        %650 = vmatpush.msra.mxu0 %v530
        %651 = vmatmul.f32.gmra.mxu0 %v540
        %v652 = vpop.f32.mrf.mxu0
        %v653 = vadd.f32 %v536, %v652
        %654 = vmatmul.f32.gmra.mxu0 %v543
        %v655 = vpop.f32.mrf.mxu0
        %v656 = vadd.f32 %v536, %v655
        %657 = vmatmul.f32.gmra.mxu0 %v546
        %v658 = vpop.f32.mrf.mxu0
        %v659 = vadd.f32 %v536, %v658
        %660 = vmatmul.f32.gmra.mxu0 %v549
        %v661 = vpop.f32.mrf.mxu0
        %v662 = vadd.f32 %v536, %v661
        %663 = vmatmul.f32.gmra.mxu0 %v552
        %v664 = vpop.f32.mrf.mxu0
        %v665 = vadd.f32 %v536, %v664
        %666 = vmatmul.f32.gmra.mxu0 %v555
        %v667 = vpop.f32.mrf.mxu0
        %v668 = vadd.f32 %v536, %v667
        %669 = vmatmul.f32.gmra.mxu0 %v558
        %v670 = vpop.f32.mrf.mxu0
        %v671 = vadd.f32 %v536, %v670
        %672 = vmatmul.f32.gmra.mxu0 %v561
        %v673 = vpop.f32.mrf.mxu0
        %v674 = vadd.f32 %v536, %v673
        %675 = vmatmul.f32.gmra.mxu0 %v564
        %v676 = vpop.f32.mrf.mxu0
        %v677 = vadd.f32 %v536, %v676
        %678 = vmatmul.f32.gmra.mxu0 %v567
        %v679 = vpop.f32.mrf.mxu0
        %v680 = vadd.f32 %v536, %v679
        %681 = vmatmul.f32.gmra.mxu0 %v570
        %v682 = vpop.f32.mrf.mxu0
        %v683 = vadd.f32 %v536, %v682
        %684 = vmatmul.f32.gmra.mxu0 %v573
        %v685 = vpop.f32.mrf.mxu0
        %v686 = vadd.f32 %v536, %v685
        %687 = vmatmul.f32.gmra.mxu0 %v576
        %v688 = vpop.f32.mrf.mxu0
        %v689 = vadd.f32 %v536, %v688
        %690 = vmatmul.f32.gmra.mxu0 %v579
        %v691 = vpop.f32.mrf.mxu0
        %v692 = vadd.f32 %v536, %v691
        %693 = vmatmul.f32.gmra.mxu0 %v582
        %v694 = vpop.f32.mrf.mxu0
        %v695 = vadd.f32 %v536, %v694
        %696 = vmatmul.f32.gmra.mxu0 %v585
        %v697 = vpop.f32.mrf.mxu0
        %v698 = vadd.f32 %v536, %v697
        %699 = vmatmul.f32.gmra.mxu0 %v588
        %v700 = vpop.f32.mrf.mxu0
        %v701 = vadd.f32 %v536, %v700
        %702 = vmatmul.f32.gmra.mxu0 %v591
        %v703 = vpop.f32.mrf.mxu0
        %v704 = vadd.f32 %v536, %v703
        %705 = vmatmul.f32.gmra.mxu0 %v594
        %v706 = vpop.f32.mrf.mxu0
        %v707 = vadd.f32 %v536, %v706
        %708 = vmatmul.f32.gmra.mxu0 %v597
        %v709 = vpop.f32.mrf.mxu0
        %v710 = vadd.f32 %v536, %v709
        %711 = vmatmul.f32.gmra.mxu0 %v600
        %v712 = vpop.f32.mrf.mxu0
        %v713 = vadd.f32 %v536, %v712
        %714 = vmatmul.f32.gmra.mxu0 %v603
        %v715 = vpop.f32.mrf.mxu0
        %v716 = vadd.f32 %v536, %v715
        %717 = vmatmul.f32.gmra.mxu0 %v606
        %v718 = vpop.f32.mrf.mxu0
        %v719 = vadd.f32 %v536, %v718
        %720 = vmatmul.f32.gmra.mxu0 %v609
        %v721 = vpop.f32.mrf.mxu0
        %v722 = vadd.f32 %v536, %v721
        %723 = vmatmul.f32.gmra.mxu0 %v612
        %v724 = vpop.f32.mrf.mxu0
        %v725 = vadd.f32 %v536, %v724
        %726 = vmatmul.f32.gmra.mxu0 %v615
        %v727 = vpop.f32.mrf.mxu0
        %v728 = vadd.f32 %v536, %v727
        %729 = vmatmul.f32.gmra.mxu0 %v618
        %v730 = vpop.f32.mrf.mxu0
        %v731 = vadd.f32 %v536, %v730
        %732 = vmatmul.f32.gmra.mxu0 %v621
        %v733 = vpop.f32.mrf.mxu0
        %v734 = vadd.f32 %v536, %v733
        %735 = vmatmul.f32.gmra.mxu0 %v624
        %v736 = vpop.f32.mrf.mxu0
        %v737 = vadd.f32 %v536, %v736
        %738 = vmatmul.f32.gmra.mxu0 %v627
        %v739 = vpop.f32.mrf.mxu0
        %v740 = vadd.f32 %v536, %v739
        %741 = vmatmul.f32.gmra.mxu0 %v630
        %v742 = vpop.f32.mrf.mxu0
        %v743 = vadd.f32 %v536, %v742
        %744 = vmatmul.f32.gmra.mxu0 %v633
        %v745 = vpop.f32.mrf.mxu0
        %v746 = vadd.f32 %v536, %v745
        %747 = vdwg.mxu0
        %v748 = vlaneseq
        %v749 = vand.u32 %v748, 127
        %vm750 = vcmp.lt.s32.totalorder %v749, 7
        %vm751 = vcmp.eq.s32.totalorder %v749, 7
        %v752 = vsel %vm750, %v653, -inf
        %v753 = vsel %vm750, %v656, -inf
        %v754 = vsel %vm750, %v659, -inf
        %v755 = vsel %vm750, %v662, -inf
        %v756 = vsel %vm750, %v665, -inf
        %v757 = vsel %vm750, %v668, -inf
        %v758 = vsel %vm750, %v671, -inf
        %v759 = vsel %vm750, %v674, -inf
        %v760 = vsel %vm750, %v677, -inf
        %v761 = vsel %vm750, %v680, -inf
        %v762 = vsel %vm750, %v683, -inf
        %v763 = vsel %vm750, %v686, -inf
        %v764 = vsel %vm750, %v689, -inf
        %v765 = vsel %vm750, %v692, -inf
        %v766 = vsel %vm750, %v695, -inf
        %v767 = vsel %vm750, %v698, -inf
        %v768 = vsel %vm750, %v701, -inf
        %v769 = vsel %vm750, %v704, -inf
        %v770 = vsel %vm750, %v707, -inf
        %v771 = vsel %vm750, %v710, -inf
        %v772 = vsel %vm750, %v713, -inf
        %v773 = vsel %vm750, %v716, -inf
        %v774 = vsel %vm750, %v719, -inf
        %v775 = vsel %vm750, %v722, -inf
        %v776 = vsel %vm750, %v725, -inf
        %v777 = vsel %vm750, %v728, -inf
        %v778 = vsel %vm750, %v731, -inf
        %v779 = vsel %vm750, %v734, -inf
        %v780 = vsel %vm750, %v737, -inf
        %v781 = vsel %vm750, %v740, -inf
        %v782 = vsel %vm750, %v743, -inf
        %v783 = vsel %vm750, %v746, -inf
        %784 = vmax.xlane.f32.xlu0 %v752
        %v785 = vpop.xlane.xlu0 %784
        %786 = vmax.xlane.f32.xlu0 %v753
        %v787 = vpop.xlane.xlu0 %786
        %788 = vmax.xlane.f32.xlu0 %v754
        %v789 = vpop.xlane.xlu0 %788
        %790 = vmax.xlane.f32.xlu0 %v755
        %v791 = vpop.xlane.xlu0 %790
        %792 = vmax.xlane.f32.xlu0 %v756
        %v793 = vpop.xlane.xlu0 %792
        %794 = vmax.xlane.f32.xlu0 %v757
        %v795 = vpop.xlane.xlu0 %794
        %796 = vmax.xlane.f32.xlu0 %v758
        %v797 = vpop.xlane.xlu0 %796
        %798 = vmax.xlane.f32.xlu0 %v759
        %v799 = vpop.xlane.xlu0 %798
        %800 = vmax.xlane.f32.xlu0 %v760
        %v801 = vpop.xlane.xlu0 %800
        %802 = vmax.xlane.f32.xlu0 %v761
        %v803 = vpop.xlane.xlu0 %802
        %804 = vmax.xlane.f32.xlu0 %v762
        %v805 = vpop.xlane.xlu0 %804
        %806 = vmax.xlane.f32.xlu0 %v763
        %v807 = vpop.xlane.xlu0 %806
        %808 = vmax.xlane.f32.xlu0 %v764
        %v809 = vpop.xlane.xlu0 %808
        %810 = vmax.xlane.f32.xlu0 %v765
        %v811 = vpop.xlane.xlu0 %810
        %812 = vmax.xlane.f32.xlu0 %v766
        %v813 = vpop.xlane.xlu0 %812
        %814 = vmax.xlane.f32.xlu0 %v767
        %v815 = vpop.xlane.xlu0 %814
        %816 = vmax.xlane.f32.xlu0 %v768
        %v817 = vpop.xlane.xlu0 %816
        %818 = vmax.xlane.f32.xlu0 %v769
        %v819 = vpop.xlane.xlu0 %818
        %820 = vmax.xlane.f32.xlu0 %v770
        %v821 = vpop.xlane.xlu0 %820
        %822 = vmax.xlane.f32.xlu0 %v771
        %v823 = vpop.xlane.xlu0 %822
        %824 = vmax.xlane.f32.xlu0 %v772
        %v825 = vpop.xlane.xlu0 %824
        %826 = vmax.xlane.f32.xlu0 %v773
        %v827 = vpop.xlane.xlu0 %826
        %828 = vmax.xlane.f32.xlu0 %v774
        %v829 = vpop.xlane.xlu0 %828
        %830 = vmax.xlane.f32.xlu0 %v775
        %v831 = vpop.xlane.xlu0 %830
        %832 = vmax.xlane.f32.xlu0 %v776
        %v833 = vpop.xlane.xlu0 %832
        %834 = vmax.xlane.f32.xlu0 %v777
        %v835 = vpop.xlane.xlu0 %834
        %836 = vmax.xlane.f32.xlu0 %v778
        %v837 = vpop.xlane.xlu0 %836
        %838 = vmax.xlane.f32.xlu0 %v779
        %v839 = vpop.xlane.xlu0 %838
        %840 = vmax.xlane.f32.xlu0 %v780
        %v841 = vpop.xlane.xlu0 %840
        %842 = vmax.xlane.f32.xlu0 %v781
        %v843 = vpop.xlane.xlu0 %842
        %844 = vmax.xlane.f32.xlu0 %v782
        %v845 = vpop.xlane.xlu0 %844
        %846 = vmax.xlane.f32.xlu0 %v783
        %v847 = vpop.xlane.xlu0 %846
        %v848 = vsub.f32 %v752, %v785
        %v849 = vsub.f32 %v753, %v787
        %v850 = vsub.f32 %v754, %v789
        %v851 = vsub.f32 %v755, %v791
        %v852 = vsub.f32 %v756, %v793
        %v853 = vsub.f32 %v757, %v795
        %v854 = vsub.f32 %v758, %v797
        %v855 = vsub.f32 %v759, %v799
        %v856 = vsub.f32 %v760, %v801
        %v857 = vsub.f32 %v761, %v803
        %v858 = vsub.f32 %v762, %v805
        %v859 = vsub.f32 %v763, %v807
        %v860 = vsub.f32 %v764, %v809
        %v861 = vsub.f32 %v765, %v811
        %v862 = vsub.f32 %v766, %v813
        %v863 = vsub.f32 %v767, %v815
        %v864 = vsub.f32 %v768, %v817
        %v865 = vsub.f32 %v769, %v819
        %v866 = vsub.f32 %v770, %v821
        %v867 = vsub.f32 %v771, %v823
        %v868 = vsub.f32 %v772, %v825
        %v869 = vsub.f32 %v773, %v827
        %v870 = vsub.f32 %v774, %v829
        %v871 = vsub.f32 %v775, %v831
        %v872 = vsub.f32 %v776, %v833
        %v873 = vsub.f32 %v777, %v835
        %v874 = vsub.f32 %v778, %v837
        %v875 = vsub.f32 %v779, %v839
        %v876 = vsub.f32 %v780, %v841
        %v877 = vsub.f32 %v781, %v843
        %v878 = vsub.f32 %v782, %v845
        %v879 = vsub.f32 %v783, %v847
        %v880 = vmul.f32 %v848, 1.442695
        %v881 = vpow.pop %v880
        %v882 = vmul.f32 %v849, 1.442695
        %v883 = vpow.pop %v882
        %v884 = vmul.f32 %v850, 1.442695
        %v885 = vpow.pop %v884
        %v886 = vmul.f32 %v851, 1.442695
        %v887 = vpow.pop %v886
        %v888 = vmul.f32 %v852, 1.442695
        %v889 = vpow.pop %v888
        %v890 = vmul.f32 %v853, 1.442695
        %v891 = vpow.pop %v890
        %v892 = vmul.f32 %v854, 1.442695
        %v893 = vpow.pop %v892
        %v894 = vmul.f32 %v855, 1.442695
        %v895 = vpow.pop %v894
        %v896 = vmul.f32 %v856, 1.442695
        %v897 = vpow.pop %v896
        %v898 = vmul.f32 %v857, 1.442695
        %v899 = vpow.pop %v898
        %v900 = vmul.f32 %v858, 1.442695
        %v901 = vpow.pop %v900
        %v902 = vmul.f32 %v859, 1.442695
        %v903 = vpow.pop %v902
        %v904 = vmul.f32 %v860, 1.442695
        %v905 = vpow.pop %v904
        %v906 = vmul.f32 %v861, 1.442695
        %v907 = vpow.pop %v906
        %v908 = vmul.f32 %v862, 1.442695
        %v909 = vpow.pop %v908
        %v910 = vmul.f32 %v863, 1.442695
        %v911 = vpow.pop %v910
        %v912 = vmul.f32 %v864, 1.442695
        %v913 = vpow.pop %v912
        %v914 = vmul.f32 %v865, 1.442695
        %v915 = vpow.pop %v914
        %v916 = vmul.f32 %v866, 1.442695
        %v917 = vpow.pop %v916
        %v918 = vmul.f32 %v867, 1.442695
        %v919 = vpow.pop %v918
        %v920 = vmul.f32 %v868, 1.442695
        %v921 = vpow.pop %v920
        %v922 = vmul.f32 %v869, 1.442695
        %v923 = vpow.pop %v922
        %v924 = vmul.f32 %v870, 1.442695
        %v925 = vpow.pop %v924
        %v926 = vmul.f32 %v871, 1.442695
        %v927 = vpow.pop %v926
        %v928 = vmul.f32 %v872, 1.442695
        %v929 = vpow.pop %v928
        %v930 = vmul.f32 %v873, 1.442695
        %v931 = vpow.pop %v930
        %v932 = vmul.f32 %v874, 1.442695
        %v933 = vpow.pop %v932
        %v934 = vmul.f32 %v875, 1.442695
        %v935 = vpow.pop %v934
        %v936 = vmul.f32 %v876, 1.442695
        %v937 = vpow.pop %v936
        %v938 = vmul.f32 %v877, 1.442695
        %v939 = vpow.pop %v938
        %v940 = vmul.f32 %v878, 1.442695
        %v941 = vpow.pop %v940
        %v942 = vmul.f32 %v879, 1.442695
        %v943 = vpow.pop %v942
        %944 = vadd.xlane.f32.xlu0 %v881
        %v945 = vpop.xlane.xlu0 %944
        %946 = vadd.xlane.f32.xlu0 %v883
        %v947 = vpop.xlane.xlu0 %946
        %948 = vadd.xlane.f32.xlu0 %v885
        %v949 = vpop.xlane.xlu0 %948
        %950 = vadd.xlane.f32.xlu0 %v887
        %v951 = vpop.xlane.xlu0 %950
        %952 = vadd.xlane.f32.xlu0 %v889
        %v953 = vpop.xlane.xlu0 %952
        %954 = vadd.xlane.f32.xlu0 %v891
        %v955 = vpop.xlane.xlu0 %954
        %956 = vadd.xlane.f32.xlu0 %v893
        %v957 = vpop.xlane.xlu0 %956
        %958 = vadd.xlane.f32.xlu0 %v895
        %v959 = vpop.xlane.xlu0 %958
        %960 = vadd.xlane.f32.xlu0 %v897
        %v961 = vpop.xlane.xlu0 %960
        %962 = vadd.xlane.f32.xlu0 %v899
        %v963 = vpop.xlane.xlu0 %962
        %964 = vadd.xlane.f32.xlu0 %v901
        %v965 = vpop.xlane.xlu0 %964
        %966 = vadd.xlane.f32.xlu0 %v903
        %v967 = vpop.xlane.xlu0 %966
        %968 = vadd.xlane.f32.xlu0 %v905
        %v969 = vpop.xlane.xlu0 %968
        %970 = vadd.xlane.f32.xlu0 %v907
        %v971 = vpop.xlane.xlu0 %970
        %972 = vadd.xlane.f32.xlu0 %v909
        %v973 = vpop.xlane.xlu0 %972
        %974 = vadd.xlane.f32.xlu0 %v911
        %v975 = vpop.xlane.xlu0 %974
        %976 = vadd.xlane.f32.xlu0 %v913
        %v977 = vpop.xlane.xlu0 %976
        %978 = vadd.xlane.f32.xlu0 %v915
        %v979 = vpop.xlane.xlu0 %978
        %980 = vadd.xlane.f32.xlu0 %v917
        %v981 = vpop.xlane.xlu0 %980
        %982 = vadd.xlane.f32.xlu0 %v919
        %v983 = vpop.xlane.xlu0 %982
        %984 = vadd.xlane.f32.xlu0 %v921
        %v985 = vpop.xlane.xlu0 %984
        %986 = vadd.xlane.f32.xlu0 %v923
        %v987 = vpop.xlane.xlu0 %986
        %988 = vadd.xlane.f32.xlu0 %v925
        %v989 = vpop.xlane.xlu0 %988
        %990 = vadd.xlane.f32.xlu0 %v927
        %v991 = vpop.xlane.xlu0 %990
        %992 = vadd.xlane.f32.xlu0 %v929
        %v993 = vpop.xlane.xlu0 %992
        %994 = vadd.xlane.f32.xlu0 %v931
        %v995 = vpop.xlane.xlu0 %994
        %996 = vadd.xlane.f32.xlu0 %v933
        %v997 = vpop.xlane.xlu0 %996
        %998 = vadd.xlane.f32.xlu0 %v935
        %v999 = vpop.xlane.xlu0 %998
        %1000 = vadd.xlane.f32.xlu0 %v937
        %v1001 = vpop.xlane.xlu0 %1000
        %1002 = vadd.xlane.f32.xlu0 %v939
        %v1003 = vpop.xlane.xlu0 %1002
        %1004 = vadd.xlane.f32.xlu0 %v941
        %v1005 = vpop.xlane.xlu0 %1004
        %1006 = vadd.xlane.f32.xlu0 %v943
        %v1007 = vpop.xlane.xlu0 %1006
        %v1008 = vrcp.pop %v945
        %v1009 = vrcp.pop %v947
        %v1010 = vrcp.pop %v949
        %v1011 = vrcp.pop %v951
        %v1012 = vrcp.pop %v953
        %v1013 = vrcp.pop %v955
        %v1014 = vrcp.pop %v957
        %v1015 = vrcp.pop %v959
        %v1016 = vrcp.pop %v961
        %v1017 = vrcp.pop %v963
        %v1018 = vrcp.pop %v965
        %v1019 = vrcp.pop %v967
        %v1020 = vrcp.pop %v969
        %v1021 = vrcp.pop %v971
        %v1022 = vrcp.pop %v973
        %v1023 = vrcp.pop %v975
        %v1024 = vrcp.pop %v977
        %v1025 = vrcp.pop %v979
        %v1026 = vrcp.pop %v981
        %v1027 = vrcp.pop %v983
        %v1028 = vrcp.pop %v985
        %v1029 = vrcp.pop %v987
        %v1030 = vrcp.pop %v989
        %v1031 = vrcp.pop %v991
        %v1032 = vrcp.pop %v993
        %v1033 = vrcp.pop %v995
        %v1034 = vrcp.pop %v997
        %v1035 = vrcp.pop %v999
        %v1036 = vrcp.pop %v1001
        %v1037 = vrcp.pop %v1003
        %v1038 = vrcp.pop %v1005
        %v1039 = vrcp.pop %v1007
        %v1040 = vmul.f32 %v881, %v1008
        %v1041 = vmul.f32 %v883, %v1009
        %v1042 = vmul.f32 %v885, %v1010
        %v1043 = vmul.f32 %v887, %v1011
        %v1044 = vmul.f32 %v889, %v1012
        %v1045 = vmul.f32 %v891, %v1013
        %v1046 = vmul.f32 %v893, %v1014
        %v1047 = vmul.f32 %v895, %v1015
        %v1048 = vmul.f32 %v897, %v1016
        %v1049 = vmul.f32 %v899, %v1017
        %v1050 = vmul.f32 %v901, %v1018
        %v1051 = vmul.f32 %v903, %v1019
        %v1052 = vmul.f32 %v905, %v1020
        %v1053 = vmul.f32 %v907, %v1021
        %v1054 = vmul.f32 %v909, %v1022
        %v1055 = vmul.f32 %v911, %v1023
        %v1056 = vmul.f32 %v913, %v1024
        %v1057 = vmul.f32 %v915, %v1025
        %v1058 = vmul.f32 %v917, %v1026
        %v1059 = vmul.f32 %v919, %v1027
        %v1060 = vmul.f32 %v921, %v1028
        %v1061 = vmul.f32 %v923, %v1029
        %v1062 = vmul.f32 %v925, %v1030
        %v1063 = vmul.f32 %v927, %v1031
        %v1064 = vmul.f32 %v929, %v1032
        %v1065 = vmul.f32 %v931, %v1033
        %v1066 = vmul.f32 %v933, %v1034
        %v1067 = vmul.f32 %v935, %v1035
        %v1068 = vmul.f32 %v937, %v1036
        %v1069 = vmul.f32 %v939, %v1037
        %v1070 = vmul.f32 %v941, %v1038
        %v1071 = vmul.f32 %v943, %v1039
        %v1072 = vmax.f32 %v653, 0.0
        %v1073 = vmax.f32 %v656, 0.0
        %v1074 = vmax.f32 %v659, 0.0
        %v1075 = vmax.f32 %v662, 0.0
        %v1076 = vmax.f32 %v665, 0.0
        %v1077 = vmax.f32 %v668, 0.0
        %v1078 = vmax.f32 %v671, 0.0
        %v1079 = vmax.f32 %v674, 0.0
        %v1080 = vmax.f32 %v677, 0.0
        %v1081 = vmax.f32 %v680, 0.0
        %v1082 = vmax.f32 %v683, 0.0
        %v1083 = vmax.f32 %v686, 0.0
        %v1084 = vmax.f32 %v689, 0.0
        %v1085 = vmax.f32 %v692, 0.0
        %v1086 = vmax.f32 %v695, 0.0
        %v1087 = vmax.f32 %v698, 0.0
        %v1088 = vmax.f32 %v701, 0.0
        %v1089 = vmax.f32 %v704, 0.0
        %v1090 = vmax.f32 %v707, 0.0
        %v1091 = vmax.f32 %v710, 0.0
        %v1092 = vmax.f32 %v713, 0.0
        %v1093 = vmax.f32 %v716, 0.0
        %v1094 = vmax.f32 %v719, 0.0
        %v1095 = vmax.f32 %v722, 0.0
        %v1096 = vmax.f32 %v725, 0.0
        %v1097 = vmax.f32 %v728, 0.0
        %v1098 = vmax.f32 %v731, 0.0
        %v1099 = vmax.f32 %v734, 0.0
        %v1100 = vmax.f32 %v737, 0.0
        %v1101 = vmax.f32 %v740, 0.0
        %v1102 = vmax.f32 %v743, 0.0
        %v1103 = vmax.f32 %v746, 0.0
        %v1104 = vand.u32 2147483647, %v653
        %v1105 = vand.u32 2147483647, %v656
        %v1106 = vand.u32 2147483647, %v659
        %v1107 = vand.u32 2147483647, %v662
        %v1108 = vand.u32 2147483647, %v665
        %v1109 = vand.u32 2147483647, %v668
        %v1110 = vand.u32 2147483647, %v671
        %v1111 = vand.u32 2147483647, %v674
        %v1112 = vand.u32 2147483647, %v677
        %v1113 = vand.u32 2147483647, %v680
        %v1114 = vand.u32 2147483647, %v683
        %v1115 = vand.u32 2147483647, %v686
        %v1116 = vand.u32 2147483647, %v689
        %v1117 = vand.u32 2147483647, %v692
        %v1118 = vand.u32 2147483647, %v695
        %v1119 = vand.u32 2147483647, %v698
        %v1120 = vand.u32 2147483647, %v701
        %v1121 = vand.u32 2147483647, %v704
        %v1122 = vand.u32 2147483647, %v707
        %v1123 = vand.u32 2147483647, %v710
        %v1124 = vand.u32 2147483647, %v713
        %v1125 = vand.u32 2147483647, %v716
        %v1126 = vand.u32 2147483647, %v719
        %v1127 = vand.u32 2147483647, %v722
        %v1128 = vand.u32 2147483647, %v725
        %v1129 = vand.u32 2147483647, %v728
        %v1130 = vand.u32 2147483647, %v731
        %v1131 = vand.u32 2147483647, %v734
        %v1132 = vand.u32 2147483647, %v737
        %v1133 = vand.u32 2147483647, %v740
        %v1134 = vand.u32 2147483647, %v743
        %v1135 = vand.u32 2147483647, %v746
        %v1136 = vsub.f32 0.0, %v1104
        %v1137 = vsub.f32 0.0, %v1105
        %v1138 = vsub.f32 0.0, %v1106
        %v1139 = vsub.f32 0.0, %v1107
        %v1140 = vsub.f32 0.0, %v1108
        %v1141 = vsub.f32 0.0, %v1109
        %v1142 = vsub.f32 0.0, %v1110
        %v1143 = vsub.f32 0.0, %v1111
        %v1144 = vsub.f32 0.0, %v1112
        %v1145 = vsub.f32 0.0, %v1113
        %v1146 = vsub.f32 0.0, %v1114
        %v1147 = vsub.f32 0.0, %v1115
        %v1148 = vsub.f32 0.0, %v1116
        %v1149 = vsub.f32 0.0, %v1117
        %v1150 = vsub.f32 0.0, %v1118
        %v1151 = vsub.f32 0.0, %v1119
        %v1152 = vsub.f32 0.0, %v1120
        %v1153 = vsub.f32 0.0, %v1121
        %v1154 = vsub.f32 0.0, %v1122
        %v1155 = vsub.f32 0.0, %v1123
        %v1156 = vsub.f32 0.0, %v1124
        %v1157 = vsub.f32 0.0, %v1125
        %v1158 = vsub.f32 0.0, %v1126
        %v1159 = vsub.f32 0.0, %v1127
        %v1160 = vsub.f32 0.0, %v1128
        %v1161 = vsub.f32 0.0, %v1129
        %v1162 = vsub.f32 0.0, %v1130
        %v1163 = vsub.f32 0.0, %v1131
        %v1164 = vsub.f32 0.0, %v1132
        %v1165 = vsub.f32 0.0, %v1133
        %v1166 = vsub.f32 0.0, %v1134
        %v1167 = vsub.f32 0.0, %v1135
        %v1168 = vmul.f32 %v1136, 1.442695
        %v1169 = vpow.pop %v1168
        %v1170 = vmul.f32 %v1137, 1.442695
        %v1171 = vpow.pop %v1170
        %v1172 = vmul.f32 %v1138, 1.442695
        %v1173 = vpow.pop %v1172
        %v1174 = vmul.f32 %v1139, 1.442695
        %v1175 = vpow.pop %v1174
        %v1176 = vmul.f32 %v1140, 1.442695
        %v1177 = vpow.pop %v1176
        %v1178 = vmul.f32 %v1141, 1.442695
        %v1179 = vpow.pop %v1178
        %v1180 = vmul.f32 %v1142, 1.442695
        %v1181 = vpow.pop %v1180
        %v1182 = vmul.f32 %v1143, 1.442695
        %v1183 = vpow.pop %v1182
        %v1184 = vmul.f32 %v1144, 1.442695
        %v1185 = vpow.pop %v1184
        %v1186 = vmul.f32 %v1145, 1.442695
        %v1187 = vpow.pop %v1186
        %v1188 = vmul.f32 %v1146, 1.442695
        %v1189 = vpow.pop %v1188
        %v1190 = vmul.f32 %v1147, 1.442695
        %v1191 = vpow.pop %v1190
        %v1192 = vmul.f32 %v1148, 1.442695
        %v1193 = vpow.pop %v1192
        %v1194 = vmul.f32 %v1149, 1.442695
        %v1195 = vpow.pop %v1194
        %v1196 = vmul.f32 %v1150, 1.442695
        %v1197 = vpow.pop %v1196
        %v1198 = vmul.f32 %v1151, 1.442695
        %v1199 = vpow.pop %v1198
        %v1200 = vmul.f32 %v1152, 1.442695
        %v1201 = vpow.pop %v1200
        %v1202 = vmul.f32 %v1153, 1.442695
        %v1203 = vpow.pop %v1202
        %v1204 = vmul.f32 %v1154, 1.442695
        %v1205 = vpow.pop %v1204
        %v1206 = vmul.f32 %v1155, 1.442695
        %v1207 = vpow.pop %v1206
        %v1208 = vmul.f32 %v1156, 1.442695
        %v1209 = vpow.pop %v1208
        %v1210 = vmul.f32 %v1157, 1.442695
        %v1211 = vpow.pop %v1210
        %v1212 = vmul.f32 %v1158, 1.442695
        %v1213 = vpow.pop %v1212
        %v1214 = vmul.f32 %v1159, 1.442695
        %v1215 = vpow.pop %v1214
        %v1216 = vmul.f32 %v1160, 1.442695
        %v1217 = vpow.pop %v1216
        %v1218 = vmul.f32 %v1161, 1.442695
        %v1219 = vpow.pop %v1218
        %v1220 = vmul.f32 %v1162, 1.442695
        %v1221 = vpow.pop %v1220
        %v1222 = vmul.f32 %v1163, 1.442695
        %v1223 = vpow.pop %v1222
        %v1224 = vmul.f32 %v1164, 1.442695
        %v1225 = vpow.pop %v1224
        %v1226 = vmul.f32 %v1165, 1.442695
        %v1227 = vpow.pop %v1226
        %v1228 = vmul.f32 %v1166, 1.442695
        %v1229 = vpow.pop %v1228
        %v1230 = vmul.f32 %v1167, 1.442695
        %v1231 = vpow.pop %v1230
        %v1232 = vadd.f32 %v1169, 1.0
        %v1233 = vlog2.pop %v1232
        %v1234 = vmul.f32 %v1233, 0.6931472
        %v1235 = vmul.f32 -0.5, %v1169
        %v1236 = vadd.f32 %v1235, 1.0
        %v1237 = vmul.f32 %v1236, %v1169
        %v1238 = vand.u32 2147483647, %v1169
        %vm1239 = vcmp.lt.f32.partialorder %v1238, 0.0004427343
        %v1240 = vsel %vm1239, %v1237, %v1234
        %v1241 = vadd.f32 %v1171, 1.0
        %v1242 = vlog2.pop %v1241
        %v1243 = vmul.f32 %v1242, 0.6931472
        %v1244 = vmul.f32 -0.5, %v1171
        %v1245 = vadd.f32 %v1244, 1.0
        %v1246 = vmul.f32 %v1245, %v1171
        %v1247 = vand.u32 2147483647, %v1171
        %vm1248 = vcmp.lt.f32.partialorder %v1247, 0.0004427343
        %v1249 = vsel %vm1248, %v1246, %v1243
        %v1250 = vadd.f32 %v1173, 1.0
        %v1251 = vlog2.pop %v1250
        %v1252 = vmul.f32 %v1251, 0.6931472
        %v1253 = vmul.f32 -0.5, %v1173
        %v1254 = vadd.f32 %v1253, 1.0
        %v1255 = vmul.f32 %v1254, %v1173
        %v1256 = vand.u32 2147483647, %v1173
        %vm1257 = vcmp.lt.f32.partialorder %v1256, 0.0004427343
        %v1258 = vsel %vm1257, %v1255, %v1252
        %v1259 = vadd.f32 %v1175, 1.0
        %v1260 = vlog2.pop %v1259
        %v1261 = vmul.f32 %v1260, 0.6931472
        %v1262 = vmul.f32 -0.5, %v1175
        %v1263 = vadd.f32 %v1262, 1.0
        %v1264 = vmul.f32 %v1263, %v1175
        %v1265 = vand.u32 2147483647, %v1175
        %vm1266 = vcmp.lt.f32.partialorder %v1265, 0.0004427343
        %v1267 = vsel %vm1266, %v1264, %v1261
        %v1268 = vadd.f32 %v1177, 1.0
        %v1269 = vlog2.pop %v1268
        %v1270 = vmul.f32 %v1269, 0.6931472
        %v1271 = vmul.f32 -0.5, %v1177
        %v1272 = vadd.f32 %v1271, 1.0
        %v1273 = vmul.f32 %v1272, %v1177
        %v1274 = vand.u32 2147483647, %v1177
        %vm1275 = vcmp.lt.f32.partialorder %v1274, 0.0004427343
        %v1276 = vsel %vm1275, %v1273, %v1270
        %v1277 = vadd.f32 %v1179, 1.0
        %v1278 = vlog2.pop %v1277
        %v1279 = vmul.f32 %v1278, 0.6931472
        %v1280 = vmul.f32 -0.5, %v1179
        %v1281 = vadd.f32 %v1280, 1.0
        %v1282 = vmul.f32 %v1281, %v1179
        %v1283 = vand.u32 2147483647, %v1179
        %vm1284 = vcmp.lt.f32.partialorder %v1283, 0.0004427343
        %v1285 = vsel %vm1284, %v1282, %v1279
        %v1286 = vadd.f32 %v1181, 1.0
        %v1287 = vlog2.pop %v1286
        %v1288 = vmul.f32 %v1287, 0.6931472
        %v1289 = vmul.f32 -0.5, %v1181
        %v1290 = vadd.f32 %v1289, 1.0
        %v1291 = vmul.f32 %v1290, %v1181
        %v1292 = vand.u32 2147483647, %v1181
        %vm1293 = vcmp.lt.f32.partialorder %v1292, 0.0004427343
        %v1294 = vsel %vm1293, %v1291, %v1288
        %v1295 = vadd.f32 %v1183, 1.0
        %v1296 = vlog2.pop %v1295
        %v1297 = vmul.f32 %v1296, 0.6931472
        %v1298 = vmul.f32 -0.5, %v1183
        %v1299 = vadd.f32 %v1298, 1.0
        %v1300 = vmul.f32 %v1299, %v1183
        %v1301 = vand.u32 2147483647, %v1183
        %vm1302 = vcmp.lt.f32.partialorder %v1301, 0.0004427343
        %v1303 = vsel %vm1302, %v1300, %v1297
        %v1304 = vadd.f32 %v1185, 1.0
        %v1305 = vlog2.pop %v1304
        %v1306 = vmul.f32 %v1305, 0.6931472
        %v1307 = vmul.f32 -0.5, %v1185
        %v1308 = vadd.f32 %v1307, 1.0
        %v1309 = vmul.f32 %v1308, %v1185
        %v1310 = vand.u32 2147483647, %v1185
        %vm1311 = vcmp.lt.f32.partialorder %v1310, 0.0004427343
        %v1312 = vsel %vm1311, %v1309, %v1306
        %v1313 = vadd.f32 %v1187, 1.0
        %v1314 = vlog2.pop %v1313
        %v1315 = vmul.f32 %v1314, 0.6931472
        %v1316 = vmul.f32 -0.5, %v1187
        %v1317 = vadd.f32 %v1316, 1.0
        %v1318 = vmul.f32 %v1317, %v1187
        %v1319 = vand.u32 2147483647, %v1187
        %vm1320 = vcmp.lt.f32.partialorder %v1319, 0.0004427343
        %v1321 = vsel %vm1320, %v1318, %v1315
        %v1322 = vadd.f32 %v1189, 1.0
        %v1323 = vlog2.pop %v1322
        %v1324 = vmul.f32 %v1323, 0.6931472
        %v1325 = vmul.f32 -0.5, %v1189
        %v1326 = vadd.f32 %v1325, 1.0
        %v1327 = vmul.f32 %v1326, %v1189
        %v1328 = vand.u32 2147483647, %v1189
        %vm1329 = vcmp.lt.f32.partialorder %v1328, 0.0004427343
        %v1330 = vsel %vm1329, %v1327, %v1324
        %v1331 = vadd.f32 %v1191, 1.0
        %v1332 = vlog2.pop %v1331
        %v1333 = vmul.f32 %v1332, 0.6931472
        %v1334 = vmul.f32 -0.5, %v1191
        %v1335 = vadd.f32 %v1334, 1.0
        %v1336 = vmul.f32 %v1335, %v1191
        %v1337 = vand.u32 2147483647, %v1191
        %vm1338 = vcmp.lt.f32.partialorder %v1337, 0.0004427343
        %v1339 = vsel %vm1338, %v1336, %v1333
        %v1340 = vadd.f32 %v1193, 1.0
        %v1341 = vlog2.pop %v1340
        %v1342 = vmul.f32 %v1341, 0.6931472
        %v1343 = vmul.f32 -0.5, %v1193
        %v1344 = vadd.f32 %v1343, 1.0
        %v1345 = vmul.f32 %v1344, %v1193
        %v1346 = vand.u32 2147483647, %v1193
        %vm1347 = vcmp.lt.f32.partialorder %v1346, 0.0004427343
        %v1348 = vsel %vm1347, %v1345, %v1342
        %v1349 = vadd.f32 %v1195, 1.0
        %v1350 = vlog2.pop %v1349
        %v1351 = vmul.f32 %v1350, 0.6931472
        %v1352 = vmul.f32 -0.5, %v1195
        %v1353 = vadd.f32 %v1352, 1.0
        %v1354 = vmul.f32 %v1353, %v1195
        %v1355 = vand.u32 2147483647, %v1195
        %vm1356 = vcmp.lt.f32.partialorder %v1355, 0.0004427343
        %v1357 = vsel %vm1356, %v1354, %v1351
        %v1358 = vadd.f32 %v1197, 1.0
        %v1359 = vlog2.pop %v1358
        %v1360 = vmul.f32 %v1359, 0.6931472
        %v1361 = vmul.f32 -0.5, %v1197
        %v1362 = vadd.f32 %v1361, 1.0
        %v1363 = vmul.f32 %v1362, %v1197
        %v1364 = vand.u32 2147483647, %v1197
        %vm1365 = vcmp.lt.f32.partialorder %v1364, 0.0004427343
        %v1366 = vsel %vm1365, %v1363, %v1360
        %v1367 = vadd.f32 %v1199, 1.0
        %v1368 = vlog2.pop %v1367
        %v1369 = vmul.f32 %v1368, 0.6931472
        %v1370 = vmul.f32 -0.5, %v1199
        %v1371 = vadd.f32 %v1370, 1.0
        %v1372 = vmul.f32 %v1371, %v1199
        %v1373 = vand.u32 2147483647, %v1199
        %vm1374 = vcmp.lt.f32.partialorder %v1373, 0.0004427343
        %v1375 = vsel %vm1374, %v1372, %v1369
        %v1376 = vadd.f32 %v1201, 1.0
        %v1377 = vlog2.pop %v1376
        %v1378 = vmul.f32 %v1377, 0.6931472
        %v1379 = vmul.f32 -0.5, %v1201
        %v1380 = vadd.f32 %v1379, 1.0
        %v1381 = vmul.f32 %v1380, %v1201
        %v1382 = vand.u32 2147483647, %v1201
        %vm1383 = vcmp.lt.f32.partialorder %v1382, 0.0004427343
        %v1384 = vsel %vm1383, %v1381, %v1378
        %v1385 = vadd.f32 %v1203, 1.0
        %v1386 = vlog2.pop %v1385
        %v1387 = vmul.f32 %v1386, 0.6931472
        %v1388 = vmul.f32 -0.5, %v1203
        %v1389 = vadd.f32 %v1388, 1.0
        %v1390 = vmul.f32 %v1389, %v1203
        %v1391 = vand.u32 2147483647, %v1203
        %vm1392 = vcmp.lt.f32.partialorder %v1391, 0.0004427343
        %v1393 = vsel %vm1392, %v1390, %v1387
        %v1394 = vadd.f32 %v1205, 1.0
        %v1395 = vlog2.pop %v1394
        %v1396 = vmul.f32 %v1395, 0.6931472
        %v1397 = vmul.f32 -0.5, %v1205
        %v1398 = vadd.f32 %v1397, 1.0
        %v1399 = vmul.f32 %v1398, %v1205
        %v1400 = vand.u32 2147483647, %v1205
        %vm1401 = vcmp.lt.f32.partialorder %v1400, 0.0004427343
        %v1402 = vsel %vm1401, %v1399, %v1396
        %v1403 = vadd.f32 %v1207, 1.0
        %v1404 = vlog2.pop %v1403
        %v1405 = vmul.f32 %v1404, 0.6931472
        %v1406 = vmul.f32 -0.5, %v1207
        %v1407 = vadd.f32 %v1406, 1.0
        %v1408 = vmul.f32 %v1407, %v1207
        %v1409 = vand.u32 2147483647, %v1207
        %vm1410 = vcmp.lt.f32.partialorder %v1409, 0.0004427343
        %v1411 = vsel %vm1410, %v1408, %v1405
        %v1412 = vadd.f32 %v1209, 1.0
        %v1413 = vlog2.pop %v1412
        %v1414 = vmul.f32 %v1413, 0.6931472
        %v1415 = vmul.f32 -0.5, %v1209
        %v1416 = vadd.f32 %v1415, 1.0
        %v1417 = vmul.f32 %v1416, %v1209
        %v1418 = vand.u32 2147483647, %v1209
        %vm1419 = vcmp.lt.f32.partialorder %v1418, 0.0004427343
        %v1420 = vsel %vm1419, %v1417, %v1414
        %v1421 = vadd.f32 %v1211, 1.0
        %v1422 = vlog2.pop %v1421
        %v1423 = vmul.f32 %v1422, 0.6931472
        %v1424 = vmul.f32 -0.5, %v1211
        %v1425 = vadd.f32 %v1424, 1.0
        %v1426 = vmul.f32 %v1425, %v1211
        %v1427 = vand.u32 2147483647, %v1211
        %vm1428 = vcmp.lt.f32.partialorder %v1427, 0.0004427343
        %v1429 = vsel %vm1428, %v1426, %v1423
        %v1430 = vadd.f32 %v1213, 1.0
        %v1431 = vlog2.pop %v1430
        %v1432 = vmul.f32 %v1431, 0.6931472
        %v1433 = vmul.f32 -0.5, %v1213
        %v1434 = vadd.f32 %v1433, 1.0
        %v1435 = vmul.f32 %v1434, %v1213
        %v1436 = vand.u32 2147483647, %v1213
        %vm1437 = vcmp.lt.f32.partialorder %v1436, 0.0004427343
        %v1438 = vsel %vm1437, %v1435, %v1432
        %v1439 = vadd.f32 %v1215, 1.0
        %v1440 = vlog2.pop %v1439
        %v1441 = vmul.f32 %v1440, 0.6931472
        %v1442 = vmul.f32 -0.5, %v1215
        %v1443 = vadd.f32 %v1442, 1.0
        %v1444 = vmul.f32 %v1443, %v1215
        %v1445 = vand.u32 2147483647, %v1215
        %vm1446 = vcmp.lt.f32.partialorder %v1445, 0.0004427343
        %v1447 = vsel %vm1446, %v1444, %v1441
        %v1448 = vadd.f32 %v1217, 1.0
        %v1449 = vlog2.pop %v1448
        %v1450 = vmul.f32 %v1449, 0.6931472
        %v1451 = vmul.f32 -0.5, %v1217
        %v1452 = vadd.f32 %v1451, 1.0
        %v1453 = vmul.f32 %v1452, %v1217
        %v1454 = vand.u32 2147483647, %v1217
        %vm1455 = vcmp.lt.f32.partialorder %v1454, 0.0004427343
        %v1456 = vsel %vm1455, %v1453, %v1450
        %v1457 = vadd.f32 %v1219, 1.0
        %v1458 = vlog2.pop %v1457
        %v1459 = vmul.f32 %v1458, 0.6931472
        %v1460 = vmul.f32 -0.5, %v1219
        %v1461 = vadd.f32 %v1460, 1.0
        %v1462 = vmul.f32 %v1461, %v1219
        %v1463 = vand.u32 2147483647, %v1219
        %vm1464 = vcmp.lt.f32.partialorder %v1463, 0.0004427343
        %v1465 = vsel %vm1464, %v1462, %v1459
        %v1466 = vadd.f32 %v1221, 1.0
        %v1467 = vlog2.pop %v1466
        %v1468 = vmul.f32 %v1467, 0.6931472
        %v1469 = vmul.f32 -0.5, %v1221
        %v1470 = vadd.f32 %v1469, 1.0
        %v1471 = vmul.f32 %v1470, %v1221
        %v1472 = vand.u32 2147483647, %v1221
        %vm1473 = vcmp.lt.f32.partialorder %v1472, 0.0004427343
        %v1474 = vsel %vm1473, %v1471, %v1468
        %v1475 = vadd.f32 %v1223, 1.0
        %v1476 = vlog2.pop %v1475
        %v1477 = vmul.f32 %v1476, 0.6931472
        %v1478 = vmul.f32 -0.5, %v1223
        %v1479 = vadd.f32 %v1478, 1.0
        %v1480 = vmul.f32 %v1479, %v1223
        %v1481 = vand.u32 2147483647, %v1223
        %vm1482 = vcmp.lt.f32.partialorder %v1481, 0.0004427343
        %v1483 = vsel %vm1482, %v1480, %v1477
        %v1484 = vadd.f32 %v1225, 1.0
        %v1485 = vlog2.pop %v1484
        %v1486 = vmul.f32 %v1485, 0.6931472
        %v1487 = vmul.f32 -0.5, %v1225
        %v1488 = vadd.f32 %v1487, 1.0
        %v1489 = vmul.f32 %v1488, %v1225
        %v1490 = vand.u32 2147483647, %v1225
        %vm1491 = vcmp.lt.f32.partialorder %v1490, 0.0004427343
        %v1492 = vsel %vm1491, %v1489, %v1486
        %v1493 = vadd.f32 %v1227, 1.0
        %v1494 = vlog2.pop %v1493
        %v1495 = vmul.f32 %v1494, 0.6931472
        %v1496 = vmul.f32 -0.5, %v1227
        %v1497 = vadd.f32 %v1496, 1.0
        %v1498 = vmul.f32 %v1497, %v1227
        %v1499 = vand.u32 2147483647, %v1227
        %vm1500 = vcmp.lt.f32.partialorder %v1499, 0.0004427343
        %v1501 = vsel %vm1500, %v1498, %v1495
        %v1502 = vadd.f32 %v1229, 1.0
        %v1503 = vlog2.pop %v1502
        %v1504 = vmul.f32 %v1503, 0.6931472
        %v1505 = vmul.f32 -0.5, %v1229
        %v1506 = vadd.f32 %v1505, 1.0
        %v1507 = vmul.f32 %v1506, %v1229
        %v1508 = vand.u32 2147483647, %v1229
        %vm1509 = vcmp.lt.f32.partialorder %v1508, 0.0004427343
        %v1510 = vsel %vm1509, %v1507, %v1504
        %v1511 = vadd.f32 %v1231, 1.0
        %v1512 = vlog2.pop %v1511
        %v1513 = vmul.f32 %v1512, 0.6931472
        %v1514 = vmul.f32 -0.5, %v1231
        %v1515 = vadd.f32 %v1514, 1.0
        %v1516 = vmul.f32 %v1515, %v1231
        %v1517 = vand.u32 2147483647, %v1231
        %vm1518 = vcmp.lt.f32.partialorder %v1517, 0.0004427343
        %v1519 = vsel %vm1518, %v1516, %v1513
        %v1520 = vadd.f32 %v1072, %v1240
        %v1521 = vadd.f32 %v1073, %v1249
        %v1522 = vadd.f32 %v1074, %v1258
        %v1523 = vadd.f32 %v1075, %v1267
        %v1524 = vadd.f32 %v1076, %v1276
        %v1525 = vadd.f32 %v1077, %v1285
        %v1526 = vadd.f32 %v1078, %v1294
        %v1527 = vadd.f32 %v1079, %v1303
        %v1528 = vadd.f32 %v1080, %v1312
        %v1529 = vadd.f32 %v1081, %v1321
        %v1530 = vadd.f32 %v1082, %v1330
        %v1531 = vadd.f32 %v1083, %v1339
        %v1532 = vadd.f32 %v1084, %v1348
        %v1533 = vadd.f32 %v1085, %v1357
        %v1534 = vadd.f32 %v1086, %v1366
        %v1535 = vadd.f32 %v1087, %v1375
        %v1536 = vadd.f32 %v1088, %v1384
        %v1537 = vadd.f32 %v1089, %v1393
        %v1538 = vadd.f32 %v1090, %v1402
        %v1539 = vadd.f32 %v1091, %v1411
        %v1540 = vadd.f32 %v1092, %v1420
        %v1541 = vadd.f32 %v1093, %v1429
        %v1542 = vadd.f32 %v1094, %v1438
        %v1543 = vadd.f32 %v1095, %v1447
        %v1544 = vadd.f32 %v1096, %v1456
        %v1545 = vadd.f32 %v1097, %v1465
        %v1546 = vadd.f32 %v1098, %v1474
        %v1547 = vadd.f32 %v1099, %v1483
        %v1548 = vadd.f32 %v1100, %v1492
        %v1549 = vadd.f32 %v1101, %v1501
        %v1550 = vadd.f32 %v1102, %v1510
        %v1551 = vadd.f32 %v1103, %v1519
        %v1552 = vsel %vm751, %v1520, %v1040
        %v1553 = vsel %vm751, %v1521, %v1041
        %v1554 = vsel %vm751, %v1522, %v1042
        %v1555 = vsel %vm751, %v1523, %v1043
        %v1556 = vsel %vm751, %v1524, %v1044
        %v1557 = vsel %vm751, %v1525, %v1045
        %v1558 = vsel %vm751, %v1526, %v1046
        %v1559 = vsel %vm751, %v1527, %v1047
        %v1560 = vsel %vm751, %v1528, %v1048
        %v1561 = vsel %vm751, %v1529, %v1049
        %v1562 = vsel %vm751, %v1530, %v1050
        %v1563 = vsel %vm751, %v1531, %v1051
        %v1564 = vsel %vm751, %v1532, %v1052
        %v1565 = vsel %vm751, %v1533, %v1053
        %v1566 = vsel %vm751, %v1534, %v1054
        %v1567 = vsel %vm751, %v1535, %v1055
        %v1568 = vsel %vm751, %v1536, %v1056
        %v1569 = vsel %vm751, %v1537, %v1057
        %v1570 = vsel %vm751, %v1538, %v1058
        %v1571 = vsel %vm751, %v1539, %v1059
        %v1572 = vsel %vm751, %v1540, %v1060
        %v1573 = vsel %vm751, %v1541, %v1061
        %v1574 = vsel %vm751, %v1542, %v1062
        %v1575 = vsel %vm751, %v1543, %v1063
        %v1576 = vsel %vm751, %v1544, %v1064
        %v1577 = vsel %vm751, %v1545, %v1065
        %v1578 = vsel %vm751, %v1546, %v1066
        %v1579 = vsel %vm751, %v1547, %v1067
        %v1580 = vsel %vm751, %v1548, %v1068
        %v1581 = vsel %vm751, %v1549, %v1069
        %v1582 = vsel %vm751, %v1550, %v1070
        %v1583 = vsel %vm751, %v1551, %v1071
        %v1584 = vpack.c.bf16 %v1552, %v1552
        %v1585 = vpack.c.bf16 %v1553, %v1553
        %v1586 = vpack.c.bf16 %v1554, %v1554
        %v1587 = vpack.c.bf16 %v1555, %v1555
        %v1588 = vpack.c.bf16 %v1556, %v1556
        %v1589 = vpack.c.bf16 %v1557, %v1557
        %v1590 = vpack.c.bf16 %v1558, %v1558
        %v1591 = vpack.c.bf16 %v1559, %v1559
        %v1592 = vpack.c.bf16 %v1560, %v1560
        %v1593 = vpack.c.bf16 %v1561, %v1561
        %v1594 = vpack.c.bf16 %v1562, %v1562
        %v1595 = vpack.c.bf16 %v1563, %v1563
        %v1596 = vpack.c.bf16 %v1564, %v1564
        %v1597 = vpack.c.bf16 %v1565, %v1565
        %v1598 = vpack.c.bf16 %v1566, %v1566
        %v1599 = vpack.c.bf16 %v1567, %v1567
        %v1600 = vpack.c.bf16 %v1568, %v1568
        %v1601 = vpack.c.bf16 %v1569, %v1569
        %v1602 = vpack.c.bf16 %v1570, %v1570
        %v1603 = vpack.c.bf16 %v1571, %v1571
        %v1604 = vpack.c.bf16 %v1572, %v1572
        %v1605 = vpack.c.bf16 %v1573, %v1573
        %v1606 = vpack.c.bf16 %v1574, %v1574
        %v1607 = vpack.c.bf16 %v1575, %v1575
        %v1608 = vpack.c.bf16 %v1576, %v1576
        %v1609 = vpack.c.bf16 %v1577, %v1577
        %v1610 = vpack.c.bf16 %v1578, %v1578
        %v1611 = vpack.c.bf16 %v1579, %v1579
        %v1612 = vpack.c.bf16 %v1580, %v1580
        %v1613 = vpack.c.bf16 %v1581, %v1581
        %v1614 = vpack.c.bf16 %v1582, %v1582
        %v1615 = vpack.c.bf16 %v1583, %v1583
        %1616 = vst [vmem:[%s230] sm:$0xf] %v1584
        %1617 = vst [vmem:[%s230 + $0x4] sm:$0xf] %v1585
        %1618 = vst [vmem:[%s230 + $0x8] sm:$0xf] %v1586
        %1619 = vst [vmem:[%s230 + $0xc] sm:$0xf] %v1587
        %1620 = vst [vmem:[%s230 + $0x10] sm:$0xf] %v1588
        %1621 = vst [vmem:[%s230 + $0x14] sm:$0xf] %v1589
        %1622 = vst [vmem:[%s230 + $0x18] sm:$0xf] %v1590
        %1623 = vst [vmem:[%s230 + $0x1c] sm:$0xf] %v1591
        %1624 = vst [vmem:[%s230 + $0x20] sm:$0xf] %v1592
        %1625 = vst [vmem:[%s230 + $0x24] sm:$0xf] %v1593
        %1626 = vst [vmem:[%s230 + $0x28] sm:$0xf] %v1594
        %1627 = vst [vmem:[%s230 + $0x2c] sm:$0xf] %v1595
        %1628 = vst [vmem:[%s230 + $0x30] sm:$0xf] %v1596
        %1629 = vst [vmem:[%s230 + $0x34] sm:$0xf] %v1597
        %1630 = vst [vmem:[%s230 + $0x38] sm:$0xf] %v1598
        %1631 = vst [vmem:[%s230 + $0x3c] sm:$0xf] %v1599
        %1632 = vst [vmem:[%s230 + $0x40] sm:$0xf] %v1600
        %1633 = vst [vmem:[%s230 + $0x44] sm:$0xf] %v1601
        %1634 = vst [vmem:[%s230 + $0x48] sm:$0xf] %v1602
        %1635 = vst [vmem:[%s230 + $0x4c] sm:$0xf] %v1603
        %1636 = vst [vmem:[%s230 + $0x50] sm:$0xf] %v1604
        %1637 = vst [vmem:[%s230 + $0x54] sm:$0xf] %v1605
        %1638 = vst [vmem:[%s230 + $0x58] sm:$0xf] %v1606
        %1639 = vst [vmem:[%s230 + $0x5c] sm:$0xf] %v1607
        %1640 = vst [vmem:[%s230 + $0x60] sm:$0xf] %v1608
        %1641 = vst [vmem:[%s230 + $0x64] sm:$0xf] %v1609
        %1642 = vst [vmem:[%s230 + $0x68] sm:$0xf] %v1610
        %1643 = vst [vmem:[%s230 + $0x6c] sm:$0xf] %v1611
        %1644 = vst [vmem:[%s230 + $0x70] sm:$0xf] %v1612
        %1645 = vst [vmem:[%s230 + $0x74] sm:$0xf] %v1613
        %1646 = vst [vmem:[%s230 + $0x78] sm:$0xf] %v1614
        %1647 = vst [vmem:[%s230 + $0x7c] sm:$0xf] %v1615
        %s1648 = sand.u32 %s137, 1
        %s1649 = scalar_lea.sflag [#allocation3], %s1648
        %s1650 = sand.u32 %s137, 1
        %s1651 = smul.addr %s1650, 128
        %s1652 = scalar_lea.vmem [#allocation2], %s1651
        // Predicated region
        $region41: #{tpu_custom_call.1} parent=39 // pred_check
          %p1653 = pneg %p147
        $region42: #{tpu_custom_call.1} parent=39 // pred_check_branch
          %1655 = sbr.rel (%p1653) target = $region44
        $region43: #{tpu_custom_call.1} parent=39 // pred_region
          %s1656 = smul.u32 32, %s19
          %s1657 = ssub.s32 125, %s1656
          %p1658 = scmp.lt.s32.totalorder %s1657, 32
          %s1659 = scalar_select %p1658, %s1657, 32
          %s1660 = smul.u32 4, %s1659
          %s1661 = ssub.s32 128, %s1660
          %s1662 = sshll.u32 %s1661, 4
          %1663 = vsyncadd %s1649, %s1662
          %p1664 = scmp.ne.s32.totalorder 0, %s1660
          %s1665 = smul.addr %s1656, 4
          %s1666 = scalar_lea.hbm %s5, %s1665
          %s1667 = smul.u32 4, %s1659
          %s1668 = sshll.u32 %s1652, 4
          %s1669 = int_to_ptr.vmem [resolvable:$true] %s1668
          %s1670 = sshll.u32 %s1666, 4
          %s1671 = int_to_ptr.hbm [resolvable:$true] %s1670
          %s1672 = sshll.u32 %s1667, 4
          %1676 = dma.vmem_to_hbm [thread:$0]  (%p1664), %s1669, %s1672, %s1671, %s1649, 64, 64, 4
        $region44: #{tpu_custom_call.1} parent=39 // pred_fallthru
          _
      $region40: #{tpu_custom_call.1} parent=5 // pred_fallthru
        _
      %p1677 = scmp.le.s32.totalorder 2, %s14
      // Predicated region
      $region45: #{tpu_custom_call.1} parent=5 // pred_check
        %p1678 = pneg %p1677
      $region46: #{tpu_custom_call.1} parent=5 // pred_check_branch
        %1680 = sbr.rel (%p1678) target = $region48
      $region47: #{tpu_custom_call.1} parent=5 // pred_region
        %s1681 = ssub.s32 %s14, 2
        // Predicated region
        $region49: #{tpu_custom_call.1} parent=47 // pred_check
          %p1682 = pneg %p153
        $region50: #{tpu_custom_call.1} parent=47 // pred_check_branch
          %1684 = sbr.rel (%p1682) target = $region52
        $region51: #{tpu_custom_call.1} parent=47 // pred_region
          %s1685 = sand.u32 %s138, 1
          %s1686 = scalar_lea.sflag [#allocation3], %s1685
          %s1687 = sand.u32 %s138, 1
          %s1688 = smul.addr %s1687, 128
          %s1689 = scalar_lea.vmem [#allocation2], %s1688
          %1691 = dma.done %s1686, 2048
        $region52: #{tpu_custom_call.1} parent=47 // pred_fallthru
          _
      $region48: #{tpu_custom_call.1} parent=5 // pred_fallthru
        _
    $region6: #{tpu_custom_call.1} parent=1 // loop_footer
      %s18 = sadd.s32 1, %s14
    $region7: #{tpu_custom_call.1} parent=1 // loop_footer_branch
      %13 = sbr.rel target = $region3
    $region8: #{tpu_custom_call.1} parent=1 // loop_exit
      _
    %1692 = vsyncpa [#allocation3], 1
    %s1693 = scalar_lea.sflag [#allocation3], 1
    %1694 = vsyncpa %s1693, 1

</llo_original>
